<compile_context>
chip_gen: v7x
topology: tpu7x:2x2x1
jax: 0.10.0
libtpu: 0.0.40
codegen_flags: <defaults>
</compile_context>

<pallas_src>
import jax
import jax.numpy as jnp
from jax.experimental import pallas as pl
from jax.experimental.pallas import tpu as pltpu


def _double_conv_kernel(xa_ref, xh_ref, w1_ref, s1_ref, b1_ref,
                        w2_ref, s2_ref, b2_ref, o_ref):
    """One (batch, row-tile): conv3x3 -> BN -> SiLU -> conv3x3 -> BN -> SiLU.

    xa_ref: (1, TH, W+2, Cin)   main row slab of the (H+4, W+2)-padded input
    xh_ref: (1, 4,  W+2, Cin)   the 4 rows directly below the main slab
    w1_ref: (9*Cin,  Cmid) bf16   w2_ref: (9*Cmid, Cout) bf16  (im2col layout)
    s*_ref / b*_ref: (1, C) f32 folded BatchNorm scale / bias
    o_ref : (1, TH, W, Cout)
    """
    _, TH, Wp, Cin = xa_ref.shape
    W = Wp - 2
    Cmid = w1_ref.shape[1]
    Cout = w2_ref.shape[1]
    R = TH + 2                       # conv1 rows this tile needs (incl. halo)

    h = pl.program_id(1)
    num_h = pl.num_programs(1)

    # (TH+4)-row input window for this tile.
    xw = jnp.concatenate([xa_ref[0], xh_ref[0]], axis=0)       # (TH+4, W+2, Cin)

    # ---- conv1: one im2col matmul (R*W, 9*Cin) @ (9*Cin, Cmid) on the MXU ----
    p1 = jnp.concatenate(
        [xw[dy:dy + R, dx:dx + W, :] for dy in range(3) for dx in range(3)],
        axis=-1).reshape(R * W, 9 * Cin)
    acc1 = jnp.dot(p1.astype(jnp.bfloat16), w1_ref[...],
                   preferred_element_type=jnp.float32)

    # BatchNorm (folded) + SiLU in f32 on the VPU/EUP.
    y = acc1 * s1_ref[...] + b1_ref[...]
    y = y * jax.nn.sigmoid(y)
    y = y.reshape(R, W, Cmid)

    # Rows 0 / R-1 are conv2's zero padding when this tile touches the image
    # top / bottom; elsewhere they are valid recomputed neighbour rows.
    row = jax.lax.broadcasted_iota(jnp.int32, (R, 1, 1), 0)
    pad_row = jnp.logical_or(jnp.logical_and(h == 0, row == 0),
                             jnp.logical_and(h == num_h - 1, row == R - 1))
    y = jnp.where(pad_row, 0.0, y)

    # W padding, value-level (no double-written padded VMEM scratch).
    zcol = jnp.zeros((R, 1, Cmid), jnp.float32)
    yp = jnp.concatenate([zcol, y, zcol], axis=1)              # (R, W+2, Cmid)

    # ---- conv2: one im2col matmul (TH*W, 9*Cmid) @ (9*Cmid, Cout) ----
    p2 = jnp.concatenate(
        [yp[dy:dy + TH, dx:dx + W, :] for dy in range(3) for dx in range(3)],
        axis=-1).reshape(TH * W, 9 * Cmid)
    acc2 = jnp.dot(p2.astype(jnp.bfloat16), w2_ref[...],
                   preferred_element_type=jnp.float32)

    z = acc2 * s2_ref[...] + b2_ref[...]
    z = z * jax.nn.sigmoid(z)

    # Dropout2d is identity in eval mode.
    # TODO(synk): training-mode BatchNorm statistics and Dropout2d.
    o_ref[...] = z.reshape(1, TH, W, Cout).astype(o_ref.dtype)


def _pick_row_tile(H, target):
    """Largest multiple of 4 that divides H and is <= target."""
    th = 4
    cand = 4
    while cand <= min(target, H):
        if H % cand == 0:
            th = cand
        cand += 4
    return th


def double_conv(x_nchw, w1, bn1, w2, bn2, eps=1e-5, row_tile=32):
    """Eval-mode DoubleConv.  x_nchw: (N, Cin, H, W); w*: (3,3,Cin,Cout) HWIO;
    bn*: (gamma, beta, running_mean, running_var)."""
    N, Cin, H, W = x_nchw.shape
    Cmid = w1.shape[-1]
    Cout = w2.shape[-1]
    assert H % 4 == 0, "H must be a multiple of 4 for the row-tile halo scheme"
    TH = _pick_row_tile(H, row_tile)
    HB = H // TH
    Wp = W + 2

    x = jnp.transpose(x_nchw, (0, 2, 3, 1))                    # NCHW -> NHWC
    # Pad W by 1 (conv1) and H by 2 per side (conv1 + conv2) so every row tile
    # can recompute its conv1 halo rows from plain Blocked input blocks.
    # TODO(synk): fold pad/transpose into the kernel (masked loads) to avoid an
    # extra HBM round-trip on very large inputs.
    xpp = jnp.pad(x, ((0, 0), (2, 2), (1, 1), (0, 0)))

    def fold(gamma, beta, mean, var):
        scale = gamma / jnp.sqrt(var + eps)
        bias = beta - mean * scale
        return (scale.reshape(1, -1).astype(jnp.float32),
                bias.reshape(1, -1).astype(jnp.float32))

    s1, b1 = fold(*bn1)
    s2, b2 = fold(*bn2)

    # im2col weight layout, pre-cast to bf16 for the MXU (f32 accumulation).
    w1r = w1.reshape(9 * Cin, Cmid).astype(jnp.bfloat16)
    w2r = w2.reshape(9 * Cmid, Cout).astype(jnp.bfloat16)

    flops = 2 * N * H * W * 9 * (Cin * Cmid + Cmid * Cout)
    transcendentals = N * H * W * (Cmid + Cout)                # sigmoids
    bytes_accessed = int(xpp.size) * 4 + int(w1r.size) * 2 + int(w2r.size) * 2 \
        + N * H * W * Cout * 4

    out_nhwc = pl.pallas_call(
        _double_conv_kernel,
        out_shape=jax.ShapeDtypeStruct((N, H, W, Cout), x.dtype),
        grid_spec=pltpu.PrefetchScalarGridSpec(
            num_scalar_prefetch=0,
            grid=(N, HB),
            in_specs=[
                # main TH-row slab of the padded input
                pl.BlockSpec((1, TH, Wp, Cin), lambda n, h: (n, h, 0, 0)),
                # 4-row halo slab just below it (same array, finer blocking)
                pl.BlockSpec((1, 4, Wp, Cin),
                             lambda n, h: (n, (h + 1) * (TH // 4), 0, 0)),
                pl.BlockSpec((9 * Cin, Cmid), lambda n, h: (0, 0)),
                pl.BlockSpec((1, Cmid), lambda n, h: (0, 0)),
                pl.BlockSpec((1, Cmid), lambda n, h: (0, 0)),
                pl.BlockSpec((9 * Cmid, Cout), lambda n, h: (0, 0)),
                pl.BlockSpec((1, Cout), lambda n, h: (0, 0)),
                pl.BlockSpec((1, Cout), lambda n, h: (0, 0)),
            ],
            out_specs=pl.BlockSpec((1, TH, W, Cout), lambda n, h: (n, h, 0, 0)),
        ),
        compiler_params=pltpu.CompilerParams(
            dimension_semantics=("parallel", "parallel"),
            vmem_limit_bytes=32 * 1024 * 1024),
        cost_estimate=pl.CostEstimate(flops=flops,
                                      transcendentals=transcendentals,
                                      bytes_accessed=bytes_accessed),
    )(xpp, xpp, w1r, s1, b1, w2r, s2, b2)

    return jnp.transpose(out_nhwc, (0, 3, 1, 2))               # NHWC -> NCHW


def _ref_double_conv(x, w1, bn1, w2, bn2, eps=1e-5):
    """Pure-JAX reference (NCHW) mirroring the kernel: bf16 MXU operands,
    f32 accumulation, f32 BN + SiLU (PyTorch eval-mode forward)."""
    def conv(v, w):
        return jax.lax.conv_general_dilated(
            v.astype(jnp.bfloat16), w.astype(jnp.bfloat16),
            window_strides=(1, 1), padding=((1, 1), (1, 1)),
            dimension_numbers=("NCHW", "HWIO", "NCHW"),
            preferred_element_type=jnp.float32)

    def bn(v, gamma, beta, mean, var):
        sh = (1, -1, 1, 1)
        return ((v - mean.reshape(sh)) / jnp.sqrt(var.reshape(sh) + eps)
                * gamma.reshape(sh) + beta.reshape(sh))

    y = conv(x, w1); y = bn(y, *bn1); y = y * jax.nn.sigmoid(y)
    z = conv(y, w2); z = bn(z, *bn2); z = z * jax.nn.sigmoid(z)
    return z


if __name__ == "__main__":
    key = jax.random.PRNGKey(0)
    N, Cin, Cout, H, W = 2, 4, 8, 16, 16
    Cmid = Cout  # DoubleConv default: mid_channels = out_channels

    k = jax.random.split(key, 8)
    x = jax.random.normal(k[0], (N, Cin, H, W), jnp.float32)

    # Kaiming-uniform-ish deterministic init, stored as (kh, kw, Cin, Cout).
    def conv_init(kk, cin, cout):
        fan_in = cin * 9
        bound = (6.0 / fan_in) ** 0.5
        return jax.random.uniform(kk, (3, 3, cin, cout), jnp.float32, -bound, bound)

    w1 = conv_init(k[1], Cin, Cmid)
    w2 = conv_init(k[2], Cmid, Cout)

    def bn_init(kg, kb, c):
        gamma = jax.random.uniform(kg, (c,), jnp.float32, 0.5, 1.5)
        beta = 0.1 * jax.random.normal(kb, (c,), jnp.float32)
        mean = jnp.zeros((c,), jnp.float32)
        var = jnp.ones((c,), jnp.float32)
        return (gamma, beta, mean, var)

    bn1 = bn_init(k[3], k[4], Cmid)
    bn2 = bn_init(k[5], k[6], Cout)

    # row_tile=8 -> 2 row tiles per image: exercises the cross-tile halo path.
    out = double_conv(x, w1, bn1, w2, bn2, row_tile=8)
    out = jax.block_until_ready(out)

    ref = _ref_double_conv(x, w1, bn1, w2, bn2)
    assert out.shape == (N, Cout, H, W)
    err = jnp.max(jnp.abs(out - ref))
    assert jnp.allclose(out, ref, atol=2e-2, rtol=2e-2), f"max abs err {err}"

    print("KERNEL_OK")
</pallas_src>

<mosaic_0001>
module attributes {stable_mosaic.version = 11 : i64} {
  func.func @_double_conv_kernel(%arg0: i32, %arg1: i32, %arg2: memref<1x8x18x4xf32, #tpu.memory_space<vmem>>, %arg3: memref<1x4x18x4xf32, #tpu.memory_space<vmem>>, %arg4: memref<36x8xbf16, #tpu.memory_space<vmem>>, %arg5: memref<1x8xf32, #tpu.memory_space<vmem>>, %arg6: memref<1x8xf32, #tpu.memory_space<vmem>>, %arg7: memref<72x8xbf16, #tpu.memory_space<vmem>>, %arg8: memref<1x8xf32, #tpu.memory_space<vmem>>, %arg9: memref<1x8xf32, #tpu.memory_space<vmem>>, %arg10: memref<1x8x16x8xf32, #tpu.memory_space<vmem>>) attributes {dimension_semantics = [#tpu.dimension_semantics<parallel>, #tpu.dimension_semantics<parallel>], iteration_bounds = array<i64: 2, 2>, scalar_prefetch = 0 : i64, scratch_operands = 0 : i64, tpu.core_type = #tpu.core_type<tc>, window_params = [{transform_indices = @transform_0, window_bounds = array<i64: 1, 8, 18, 4>}, {transform_indices = @transform_1, window_bounds = array<i64: 1, 4, 18, 4>}, {pipeline_mode = #tpu.pipeline_mode<synchronous>, transform_indices = @transform_2, window_bounds = array<i64: 36, 8>}, {pipeline_mode = #tpu.pipeline_mode<synchronous>, transform_indices = @transform_3, window_bounds = array<i64: 1, 8>}, {pipeline_mode = #tpu.pipeline_mode<synchronous>, transform_indices = @transform_4, window_bounds = array<i64: 1, 8>}, {pipeline_mode = #tpu.pipeline_mode<synchronous>, transform_indices = @transform_5, window_bounds = array<i64: 72, 8>}, {pipeline_mode = #tpu.pipeline_mode<synchronous>, transform_indices = @transform_6, window_bounds = array<i64: 1, 8>}, {pipeline_mode = #tpu.pipeline_mode<synchronous>, transform_indices = @transform_7, window_bounds = array<i64: 1, 8>}, {transform_indices = @transform_8, window_bounds = array<i64: 1, 8, 16, 8>}]} {
    %c0 = arith.constant 0 : index
    %c0_0 = arith.constant 0 : index
    %c0_1 = arith.constant 0 : index
    %c0_2 = arith.constant 0 : index
    %0 = vector.load %arg2[%c0, %c0_0, %c0_1, %c0_2] : memref<1x8x18x4xf32, #tpu.memory_space<vmem>>, vector<1x8x18x4xf32>
    %1 = vector.shape_cast %0 : vector<1x8x18x4xf32> to vector<8x18x4xf32>
    %c0_3 = arith.constant 0 : index
    %c0_4 = arith.constant 0 : index
    %c0_5 = arith.constant 0 : index
    %c0_6 = arith.constant 0 : index
    %2 = vector.load %arg3[%c0_3, %c0_4, %c0_5, %c0_6] : memref<1x4x18x4xf32, #tpu.memory_space<vmem>>, vector<1x4x18x4xf32>
    %3 = vector.shape_cast %2 : vector<1x4x18x4xf32> to vector<4x18x4xf32>
    %4 = tpu.concatenate %1, %3 in 0 : vector<8x18x4xf32>, vector<4x18x4xf32> -> vector<12x18x4xf32>
    %5 = vector.extract_strided_slice %4 {offsets = [0, 0, 0], sizes = [10, 16, 4], strides = [1, 1, 1]} : vector<12x18x4xf32> to vector<10x16x4xf32>
    %6 = vector.extract_strided_slice %4 {offsets = [0, 1, 0], sizes = [10, 16, 4], strides = [1, 1, 1]} : vector<12x18x4xf32> to vector<10x16x4xf32>
    %7 = vector.extract_strided_slice %4 {offsets = [0, 2, 0], sizes = [10, 16, 4], strides = [1, 1, 1]} : vector<12x18x4xf32> to vector<10x16x4xf32>
    %8 = vector.extract_strided_slice %4 {offsets = [1, 0, 0], sizes = [10, 16, 4], strides = [1, 1, 1]} : vector<12x18x4xf32> to vector<10x16x4xf32>
    %9 = vector.extract_strided_slice %4 {offsets = [1, 1, 0], sizes = [10, 16, 4], strides = [1, 1, 1]} : vector<12x18x4xf32> to vector<10x16x4xf32>
    %10 = vector.extract_strided_slice %4 {offsets = [1, 2, 0], sizes = [10, 16, 4], strides = [1, 1, 1]} : vector<12x18x4xf32> to vector<10x16x4xf32>
    %11 = vector.extract_strided_slice %4 {offsets = [2, 0, 0], sizes = [10, 16, 4], strides = [1, 1, 1]} : vector<12x18x4xf32> to vector<10x16x4xf32>
    %12 = vector.extract_strided_slice %4 {offsets = [2, 1, 0], sizes = [10, 16, 4], strides = [1, 1, 1]} : vector<12x18x4xf32> to vector<10x16x4xf32>
    %13 = vector.extract_strided_slice %4 {offsets = [2, 2, 0], sizes = [10, 16, 4], strides = [1, 1, 1]} : vector<12x18x4xf32> to vector<10x16x4xf32>
    %14 = tpu.concatenate %5, %6, %7, %8, %9, %10, %11, %12, %13 in 2 : vector<10x16x4xf32>, vector<10x16x4xf32>, vector<10x16x4xf32>, vector<10x16x4xf32>, vector<10x16x4xf32>, vector<10x16x4xf32>, vector<10x16x4xf32>, vector<10x16x4xf32>, vector<10x16x4xf32> -> vector<10x16x36xf32>
    %15 = vector.shape_cast %14 : vector<10x16x36xf32> to vector<160x36xf32>
    %16 = arith.truncf %15 : vector<160x36xf32> to vector<160x36xbf16>
    %c0_7 = arith.constant 0 : index
    %c0_8 = arith.constant 0 : index
    %17 = vector.load %arg4[%c0_7, %c0_8] : memref<36x8xbf16, #tpu.memory_space<vmem>>, vector<36x8xbf16>
    %cst = arith.constant dense<0.000000e+00> : vector<160x8xf32>
    %18 = tpu.matmul %16, %17, %cst {dimension_numbers = #tpu.dot_dimension_numbers<[1], [0], [0], [1], [0, 0, 1, 1], [], []>} : vector<160x36xbf16>, vector<36x8xbf16>, vector<160x8xf32> -> vector<160x8xf32>
    %c0_9 = arith.constant 0 : index
    %c0_10 = arith.constant 0 : index
    %19 = vector.load %arg5[%c0_9, %c0_10] : memref<1x8xf32, #tpu.memory_space<vmem>>, vector<1x8xf32>
    %20 = vector.broadcast %19 : vector<1x8xf32> to vector<160x8xf32>
    %21 = arith.mulf %18, %20 : vector<160x8xf32>
    %c0_11 = arith.constant 0 : index
    %c0_12 = arith.constant 0 : index
    %22 = vector.load %arg6[%c0_11, %c0_12] : memref<1x8xf32, #tpu.memory_space<vmem>>, vector<1x8xf32>
    %23 = vector.broadcast %22 : vector<1x8xf32> to vector<160x8xf32>
    %24 = arith.addf %21, %23 : vector<160x8xf32>
    %25 = arith.negf %24 : vector<160x8xf32>
    %26 = math.exp %25 : vector<160x8xf32>
    %cst_13 = arith.constant 1.000000e+00 : f32
    %27 = vector.broadcast %cst_13 : f32 to vector<160x8xf32>
    %28 = arith.addf %27, %26 : vector<160x8xf32>
    %29 = arith.divf %27, %28 : vector<160x8xf32>
    %30 = arith.mulf %24, %29 : vector<160x8xf32>
    %31 = vector.shape_cast %30 : vector<160x8xf32> to vector<10x16x8xf32>
    %32 = tpu.iota {dimensions = array<i32: 0>} : vector<10x1x1xi32>
    %c0_i32 = arith.constant 0 : i32
    %33 = arith.cmpi eq, %arg1, %c0_i32 : i32
    %c0_i32_14 = arith.constant 0 : i32
    %34 = vector.broadcast %c0_i32_14 : i32 to vector<10x1x1xi32>
    %35 = arith.cmpi eq, %32, %34 : vector<10x1x1xi32>
    %36 = vector.broadcast %33 : i1 to vector<10x1x1xi1>
    %37 = arith.andi %36, %35 : vector<10x1x1xi1>
    %c1_i32 = arith.constant 1 : i32
    %38 = arith.cmpi eq, %arg1, %c1_i32 : i32
    %c9_i32 = arith.constant 9 : i32
    %39 = vector.broadcast %c9_i32 : i32 to vector<10x1x1xi32>
    %40 = arith.cmpi eq, %32, %39 : vector<10x1x1xi32>
    %41 = vector.broadcast %38 : i1 to vector<10x1x1xi1>
    %42 = arith.andi %41, %40 : vector<10x1x1xi1>
    %43 = arith.ori %37, %42 : vector<10x1x1xi1>
    %cst_15 = arith.constant 0.000000e+00 : f32
    %44 = vector.shape_cast %43 : vector<10x1x1xi1> to vector<10x1x1xi1>
    %45 = vector.broadcast %44 : vector<10x1x1xi1> to vector<10x16x8xi1>
    %46 = vector.broadcast %cst_15 : f32 to vector<10x16x8xf32>
    %47 = arith.select %45, %46, %31 : vector<10x16x8xi1>, vector<10x16x8xf32>
    %cst_16 = arith.constant 0.000000e+00 : f32
    %48 = vector.broadcast %cst_16 : f32 to vector<10x1x8xf32>
    %49 = tpu.concatenate %48, %47, %48 in 1 : vector<10x1x8xf32>, vector<10x16x8xf32>, vector<10x1x8xf32> -> vector<10x18x8xf32>
    %50 = vector.extract_strided_slice %49 {offsets = [0, 0, 0], sizes = [8, 16, 8], strides = [1, 1, 1]} : vector<10x18x8xf32> to vector<8x16x8xf32>
    %51 = vector.extract_strided_slice %49 {offsets = [0, 1, 0], sizes = [8, 16, 8], strides = [1, 1, 1]} : vector<10x18x8xf32> to vector<8x16x8xf32>
    %52 = vector.extract_strided_slice %49 {offsets = [0, 2, 0], sizes = [8, 16, 8], strides = [1, 1, 1]} : vector<10x18x8xf32> to vector<8x16x8xf32>
    %53 = vector.extract_strided_slice %49 {offsets = [1, 0, 0], sizes = [8, 16, 8], strides = [1, 1, 1]} : vector<10x18x8xf32> to vector<8x16x8xf32>
    %54 = vector.extract_strided_slice %49 {offsets = [1, 1, 0], sizes = [8, 16, 8], strides = [1, 1, 1]} : vector<10x18x8xf32> to vector<8x16x8xf32>
    %55 = vector.extract_strided_slice %49 {offsets = [1, 2, 0], sizes = [8, 16, 8], strides = [1, 1, 1]} : vector<10x18x8xf32> to vector<8x16x8xf32>
    %56 = vector.extract_strided_slice %49 {offsets = [2, 0, 0], sizes = [8, 16, 8], strides = [1, 1, 1]} : vector<10x18x8xf32> to vector<8x16x8xf32>
    %57 = vector.extract_strided_slice %49 {offsets = [2, 1, 0], sizes = [8, 16, 8], strides = [1, 1, 1]} : vector<10x18x8xf32> to vector<8x16x8xf32>
    %58 = vector.extract_strided_slice %49 {offsets = [2, 2, 0], sizes = [8, 16, 8], strides = [1, 1, 1]} : vector<10x18x8xf32> to vector<8x16x8xf32>
    %59 = tpu.concatenate %50, %51, %52, %53, %54, %55, %56, %57, %58 in 2 : vector<8x16x8xf32>, vector<8x16x8xf32>, vector<8x16x8xf32>, vector<8x16x8xf32>, vector<8x16x8xf32>, vector<8x16x8xf32>, vector<8x16x8xf32>, vector<8x16x8xf32>, vector<8x16x8xf32> -> vector<8x16x72xf32>
    %60 = vector.shape_cast %59 : vector<8x16x72xf32> to vector<128x72xf32>
    %61 = arith.truncf %60 : vector<128x72xf32> to vector<128x72xbf16>
    %c0_17 = arith.constant 0 : index
    %c0_18 = arith.constant 0 : index
    %62 = vector.load %arg7[%c0_17, %c0_18] : memref<72x8xbf16, #tpu.memory_space<vmem>>, vector<72x8xbf16>
    %cst_19 = arith.constant dense<0.000000e+00> : vector<128x8xf32>
    %63 = tpu.matmul %61, %62, %cst_19 {dimension_numbers = #tpu.dot_dimension_numbers<[1], [0], [0], [1], [0, 0, 1, 1], [], []>} : vector<128x72xbf16>, vector<72x8xbf16>, vector<128x8xf32> -> vector<128x8xf32>
    %c0_20 = arith.constant 0 : index
    %c0_21 = arith.constant 0 : index
    %64 = vector.load %arg8[%c0_20, %c0_21] : memref<1x8xf32, #tpu.memory_space<vmem>>, vector<1x8xf32>
    %65 = vector.broadcast %64 : vector<1x8xf32> to vector<128x8xf32>
    %66 = arith.mulf %63, %65 : vector<128x8xf32>
    %c0_22 = arith.constant 0 : index
    %c0_23 = arith.constant 0 : index
    %67 = vector.load %arg9[%c0_22, %c0_23] : memref<1x8xf32, #tpu.memory_space<vmem>>, vector<1x8xf32>
    %68 = vector.broadcast %67 : vector<1x8xf32> to vector<128x8xf32>
    %69 = arith.addf %66, %68 : vector<128x8xf32>
    %70 = arith.negf %69 : vector<128x8xf32>
    %71 = math.exp %70 : vector<128x8xf32>
    %cst_24 = arith.constant 1.000000e+00 : f32
    %72 = vector.broadcast %cst_24 : f32 to vector<128x8xf32>
    %73 = arith.addf %72, %71 : vector<128x8xf32>
    %74 = arith.divf %72, %73 : vector<128x8xf32>
    %75 = arith.mulf %69, %74 : vector<128x8xf32>
    %76 = vector.shape_cast %75 : vector<128x8xf32> to vector<1x8x16x8xf32>
    %c0_25 = arith.constant 0 : index
    %c0_26 = arith.constant 0 : index
    %c0_27 = arith.constant 0 : index
    %c0_28 = arith.constant 0 : index
    %77 = vector.load %arg10[%c0_25, %c0_26, %c0_27, %c0_28] : memref<1x8x16x8xf32, #tpu.memory_space<vmem>>, vector<1x8x16x8xf32>
    tpu.vector_store %arg10[%c0_25, %c0_26, %c0_27, %c0_28], %76 {strides = array<i32>} : memref<1x8x16x8xf32, #tpu.memory_space<vmem>>, vector<1x8x16x8xf32>,
    return
  }
  func.func @transform_0(%arg0: i32, %arg1: i32) -> (i32, i32, i32, i32) {
    %c0_i32 = arith.constant 0 : i32
    %c0_i32_0 = arith.constant 0 : i32
    %c0_i32_1 = arith.constant 0 : i32
    return %arg0, %arg1, %c0_i32, %c0_i32_0 : i32, i32, i32, i32
  }
  func.func @transform_1(%arg0: i32, %arg1: i32) -> (i32, i32, i32, i32) {
    %c1_i32 = arith.constant 1 : i32
    %0 = arith.addi %arg1, %c1_i32 : i32
    %c2_i32 = arith.constant 2 : i32
    %1 = arith.muli %0, %c2_i32 : i32
    %c0_i32 = arith.constant 0 : i32
    %c0_i32_0 = arith.constant 0 : i32
    %c0_i32_1 = arith.constant 0 : i32
    return %arg0, %1, %c0_i32, %c0_i32_0 : i32, i32, i32, i32
  }
  func.func @transform_2(%arg0: i32, %arg1: i32) -> (i32, i32) {
    %c0_i32 = arith.constant 0 : i32
    %c0_i32_0 = arith.constant 0 : i32
    %c0_i32_1 = arith.constant 0 : i32
    return %c0_i32, %c0_i32_0 : i32, i32
  }
  func.func @transform_3(%arg0: i32, %arg1: i32) -> (i32, i32) {
    %c0_i32 = arith.constant 0 : i32
    %c0_i32_0 = arith.constant 0 : i32
    %c0_i32_1 = arith.constant 0 : i32
    return %c0_i32, %c0_i32_0 : i32, i32
  }
  func.func @transform_4(%arg0: i32, %arg1: i32) -> (i32, i32) {
    %c0_i32 = arith.constant 0 : i32
    %c0_i32_0 = arith.constant 0 : i32
    %c0_i32_1 = arith.constant 0 : i32
    return %c0_i32, %c0_i32_0 : i32, i32
  }
  func.func @transform_5(%arg0: i32, %arg1: i32) -> (i32, i32) {
    %c0_i32 = arith.constant 0 : i32
    %c0_i32_0 = arith.constant 0 : i32
    %c0_i32_1 = arith.constant 0 : i32
    return %c0_i32, %c0_i32_0 : i32, i32
  }
  func.func @transform_6(%arg0: i32, %arg1: i32) -> (i32, i32) {
    %c0_i32 = arith.constant 0 : i32
    %c0_i32_0 = arith.constant 0 : i32
    %c0_i32_1 = arith.constant 0 : i32
    return %c0_i32, %c0_i32_0 : i32, i32
  }
  func.func @transform_7(%arg0: i32, %arg1: i32) -> (i32, i32) {
    %c0_i32 = arith.constant 0 : i32
    %c0_i32_0 = arith.constant 0 : i32
    %c0_i32_1 = arith.constant 0 : i32
    return %c0_i32, %c0_i32_0 : i32, i32
  }
  func.func @transform_8(%arg0: i32, %arg1: i32) -> (i32, i32, i32, i32) {
    %c0_i32 = arith.constant 0 : i32
    %c0_i32_0 = arith.constant 0 : i32
    %c0_i32_1 = arith.constant 0 : i32
    return %arg0, %arg1, %c0_i32, %c0_i32_0 : i32, i32, i32, i32
  }
}

</mosaic_0001>

<llo_original>
// kernel: tpu_custom_call.1
$region0: #{tpu_custom_call.1}
  #allocation0 [shape = 'u32[]', space=smem, size = 0x4, offset = 0x4, fixed_abs, tag = 'smem constant byte address 0x4 - core index']
  #allocation1 [shape = 'u32[144,128]{1,0:T(1,128)}', space=vmem, size = 0x12000, scoped, tag = 'internal scratch']
  %s0 = inlined_call_operand.vmem [shape: f32[2,20,18,4], index: 0, kind: input, shape index: {}]
  %s1 = inlined_call_operand.vmem [shape: f32[2,20,18,4], index: 1, kind: input, shape index: {}]
  %s2 = inlined_call_operand.vmem [shape: bf16[36,8], index: 2, kind: input, shape index: {}]
  %s3 = inlined_call_operand.vmem [shape: f32[1,8], index: 3, kind: input, shape index: {}]
  %s4 = inlined_call_operand.vmem [shape: f32[1,8], index: 4, kind: input, shape index: {}]
  %s5 = inlined_call_operand.vmem [shape: bf16[72,8], index: 5, kind: input, shape index: {}]
  %s6 = inlined_call_operand.vmem [shape: f32[1,8], index: 6, kind: input, shape index: {}]
  %s7 = inlined_call_operand.vmem [shape: f32[1,8], index: 7, kind: input, shape index: {}]
  %s8 = inlined_call_operand.vmem [shape: f32[2,16,16,8], index: 8, kind: output, shape index: {}]
  %s9 = sld [smem:[#allocation0]]
  $region65: #{tpu_custom_call.1} parent=0
    _
  %s11 = ssub.s32 1, %s9
  %s12 = scalar_select 0, %s11, %s9
  loop: start=0, step=1, limit=6
  $region2: #{tpu_custom_call.1} parent=0 // loop_pre_header
    _
  $region3: #{tpu_custom_call.1} parent=0 // loop_header
    %s14 = sphi 0, %s18
    %p15 = scmp.ge.s32.totalorder %s14, 6
    %s21 = sphi 0, %s33
    %s22 = sphi 0, %s29
    %s23 = sphi 0, %s21
    %s24 = sphi 0, %s22
    %s25 = sphi 0, %s23
    %s26 = sphi 0, %s24
    %s38 = sphi 0, %s40
    %s41 = sphi 0, %s38
    %s42 = sphi 0, %s41
    %s58 = sphi 0, %s42
    %s70 = sphi 0, %s72
    %s73 = sphi 0, %s70
    %s74 = sphi 0, %s73
    %s90 = sphi 0, %s74
    %s94 = sphi 0, %s94
    %s96 = sphi 0, %s94
    %s97 = sphi 0, %s96
    %s111 = sphi 0, %s97
    %s115 = sphi 0, %s115
    %s117 = sphi 0, %s115
    %s118 = sphi 0, %s117
    %s132 = sphi 0, %s118
    %s136 = sphi 0, %s136
    %s138 = sphi 0, %s136
    %s139 = sphi 0, %s138
    %s153 = sphi 0, %s139
    %s157 = sphi 0, %s157
    %s159 = sphi 0, %s157
    %s160 = sphi 0, %s159
    %s174 = sphi 0, %s160
    %s178 = sphi 0, %s178
    %s180 = sphi 0, %s178
    %s181 = sphi 0, %s180
    %s195 = sphi 0, %s181
    %s199 = sphi 0, %s199
    %s201 = sphi 0, %s199
    %s202 = sphi 0, %s201
    %s216 = sphi 0, %s202
    %s224 = sphi 0, %s226
    %s227 = sphi 0, %s224
    %s228 = sphi 0, %s227
    %s244 = sphi 0, %s228
  $region4: #{tpu_custom_call.1} parent=0 // loop_header_branch
    %17 = sbr.rel (%p15) target = $region8
  $region5: #{tpu_custom_call.1} parent=0 // loop_body
    %s19 = ssub.s32 %s14, 1
    %s20 = ssub.s32 %s14, 2
    %s27 = sadd.s32 1, %s22
    %p28 = scmp.ge.s32.totalorder %s27, 2
    %s29 = scalar_select %p28, 0, %s27
    %s30 = sadd.s32 1, %s21
    %s31 = scalar_select %p28, %s30, %s21
    %p32 = scmp.ge.s32.totalorder %s31, 2
    %s33 = scalar_select %p32, 0, %s31
    %s34 = ssub.s32 %s21, %s33
    %s35 = ssub.s32 %s22, %s29
    %s36 = sor.u32 %s34, %s35
    %p37 = scmp.eq.s32.totalorder %s36, 0
    %s39 = sadd.s32 %s38, 1
    %s40 = scalar_select %p37, %s38, %s39
    %p43 = pneg %p37
    %p44 = scmp.eq.s32.totalorder %s14, 3
    %p45 = por %p43, %p44
    %p46 = scmp.ne.s32.totalorder %s38, %s41
    %p47 = scmp.eq.s32.totalorder %s14, 0
    %p48 = por %p46, %p47
    %p49 = scmp.ne.s32.totalorder %s38, %s41
    %p50 = scmp.eq.s32.totalorder %s19, 3
    %p51 = por %p49, %p50
    %p52 = scmp.ne.s32.totalorder %s41, %s42
    %p53 = scmp.eq.s32.totalorder %s19, 0
    %p54 = por %p52, %p53
    %p55 = scmp.ne.s32.totalorder %s41, %s42
    %p56 = scmp.eq.s32.totalorder %s20, 3
    %p57 = por %p55, %p56
    %p59 = scmp.ne.s32.totalorder %s42, %s58
    %p60 = scmp.eq.s32.totalorder %s20, 0
    %p61 = por %p59, %p60
    %s62 = sadd.s32 %s22, 1
    %s63 = smul.u32 %s62, 2
    %s64 = sadd.s32 %s29, 1
    %s65 = smul.u32 %s64, 2
    %s66 = ssub.s32 %s21, %s33
    %s67 = ssub.s32 %s63, %s65
    %s68 = sor.u32 %s66, %s67
    %p69 = scmp.eq.s32.totalorder %s68, 0
    %s71 = sadd.s32 %s70, 1
    %s72 = scalar_select %p69, %s70, %s71
    %p75 = pneg %p69
    %p76 = scmp.eq.s32.totalorder %s14, 3
    %p77 = por %p75, %p76
    %p78 = scmp.ne.s32.totalorder %s70, %s73
    %p79 = scmp.eq.s32.totalorder %s14, 0
    %p80 = por %p78, %p79
    %p81 = scmp.ne.s32.totalorder %s70, %s73
    %p82 = scmp.eq.s32.totalorder %s19, 3
    %p83 = por %p81, %p82
    %p84 = scmp.ne.s32.totalorder %s73, %s74
    %p85 = scmp.eq.s32.totalorder %s19, 0
    %p86 = por %p84, %p85
    %p87 = scmp.ne.s32.totalorder %s73, %s74
    %p88 = scmp.eq.s32.totalorder %s20, 3
    %p89 = por %p87, %p88
    %p91 = scmp.ne.s32.totalorder %s74, %s90
    %p92 = scmp.eq.s32.totalorder %s20, 0
    %p93 = por %p91, %p92
    %s95 = sadd.s32 %s94, 1
    %p98 = scmp.eq.s32.totalorder %s14, 3
    %p99 = scmp.ne.s32.totalorder %s94, %s96
    %p100 = scmp.eq.s32.totalorder %s14, 0
    %p101 = por %p99, %p100
    %p102 = scmp.ne.s32.totalorder %s94, %s96
    %p103 = scmp.eq.s32.totalorder %s19, 3
    %p104 = por %p102, %p103
    %p105 = scmp.ne.s32.totalorder %s96, %s97
    %p106 = scmp.eq.s32.totalorder %s19, 0
    %p107 = por %p105, %p106
    %p108 = scmp.ne.s32.totalorder %s96, %s97
    %p109 = scmp.eq.s32.totalorder %s20, 3
    %p110 = por %p108, %p109
    %p112 = scmp.ne.s32.totalorder %s97, %s111
    %p113 = scmp.eq.s32.totalorder %s20, 0
    %p114 = por %p112, %p113
    %s116 = sadd.s32 %s115, 1
    %p119 = scmp.eq.s32.totalorder %s14, 3
    %p120 = scmp.ne.s32.totalorder %s115, %s117
    %p121 = scmp.eq.s32.totalorder %s14, 0
    %p122 = por %p120, %p121
    %p123 = scmp.ne.s32.totalorder %s115, %s117
    %p124 = scmp.eq.s32.totalorder %s19, 3
    %p125 = por %p123, %p124
    %p126 = scmp.ne.s32.totalorder %s117, %s118
    %p127 = scmp.eq.s32.totalorder %s19, 0
    %p128 = por %p126, %p127
    %p129 = scmp.ne.s32.totalorder %s117, %s118
    %p130 = scmp.eq.s32.totalorder %s20, 3
    %p131 = por %p129, %p130
    %p133 = scmp.ne.s32.totalorder %s118, %s132
    %p134 = scmp.eq.s32.totalorder %s20, 0
    %p135 = por %p133, %p134
    %s137 = sadd.s32 %s136, 1
    %p140 = scmp.eq.s32.totalorder %s14, 3
    %p141 = scmp.ne.s32.totalorder %s136, %s138
    %p142 = scmp.eq.s32.totalorder %s14, 0
    %p143 = por %p141, %p142
    %p144 = scmp.ne.s32.totalorder %s136, %s138
    %p145 = scmp.eq.s32.totalorder %s19, 3
    %p146 = por %p144, %p145
    %p147 = scmp.ne.s32.totalorder %s138, %s139
    %p148 = scmp.eq.s32.totalorder %s19, 0
    %p149 = por %p147, %p148
    %p150 = scmp.ne.s32.totalorder %s138, %s139
    %p151 = scmp.eq.s32.totalorder %s20, 3
    %p152 = por %p150, %p151
    %p154 = scmp.ne.s32.totalorder %s139, %s153
    %p155 = scmp.eq.s32.totalorder %s20, 0
    %p156 = por %p154, %p155
    %s158 = sadd.s32 %s157, 1
    %p161 = scmp.eq.s32.totalorder %s14, 3
    %p162 = scmp.ne.s32.totalorder %s157, %s159
    %p163 = scmp.eq.s32.totalorder %s14, 0
    %p164 = por %p162, %p163
    %p165 = scmp.ne.s32.totalorder %s157, %s159
    %p166 = scmp.eq.s32.totalorder %s19, 3
    %p167 = por %p165, %p166
    %p168 = scmp.ne.s32.totalorder %s159, %s160
    %p169 = scmp.eq.s32.totalorder %s19, 0
    %p170 = por %p168, %p169
    %p171 = scmp.ne.s32.totalorder %s159, %s160
    %p172 = scmp.eq.s32.totalorder %s20, 3
    %p173 = por %p171, %p172
    %p175 = scmp.ne.s32.totalorder %s160, %s174
    %p176 = scmp.eq.s32.totalorder %s20, 0
    %p177 = por %p175, %p176
    %s179 = sadd.s32 %s178, 1
    %p182 = scmp.eq.s32.totalorder %s14, 3
    %p183 = scmp.ne.s32.totalorder %s178, %s180
    %p184 = scmp.eq.s32.totalorder %s14, 0
    %p185 = por %p183, %p184
    %p186 = scmp.ne.s32.totalorder %s178, %s180
    %p187 = scmp.eq.s32.totalorder %s19, 3
    %p188 = por %p186, %p187
    %p189 = scmp.ne.s32.totalorder %s180, %s181
    %p190 = scmp.eq.s32.totalorder %s19, 0
    %p191 = por %p189, %p190
    %p192 = scmp.ne.s32.totalorder %s180, %s181
    %p193 = scmp.eq.s32.totalorder %s20, 3
    %p194 = por %p192, %p193
    %p196 = scmp.ne.s32.totalorder %s181, %s195
    %p197 = scmp.eq.s32.totalorder %s20, 0
    %p198 = por %p196, %p197
    %s200 = sadd.s32 %s199, 1
    %p203 = scmp.eq.s32.totalorder %s14, 3
    %p204 = scmp.ne.s32.totalorder %s199, %s201
    %p205 = scmp.eq.s32.totalorder %s14, 0
    %p206 = por %p204, %p205
    %p207 = scmp.ne.s32.totalorder %s199, %s201
    %p208 = scmp.eq.s32.totalorder %s19, 3
    %p209 = por %p207, %p208
    %p210 = scmp.ne.s32.totalorder %s201, %s202
    %p211 = scmp.eq.s32.totalorder %s19, 0
    %p212 = por %p210, %p211
    %p213 = scmp.ne.s32.totalorder %s201, %s202
    %p214 = scmp.eq.s32.totalorder %s20, 3
    %p215 = por %p213, %p214
    %p217 = scmp.ne.s32.totalorder %s202, %s216
    %p218 = scmp.eq.s32.totalorder %s20, 0
    %p219 = por %p217, %p218
    %s220 = ssub.s32 %s21, %s33
    %s221 = ssub.s32 %s22, %s29
    %s222 = sor.u32 %s220, %s221
    %p223 = scmp.eq.s32.totalorder %s222, 0
    %s225 = sadd.s32 %s224, 1
    %s226 = scalar_select %p223, %s224, %s225
    %p229 = pneg %p223
    %p230 = scmp.eq.s32.totalorder %s14, 3
    %p231 = por %p229, %p230
    %p232 = scmp.ne.s32.totalorder %s224, %s227
    %p233 = scmp.eq.s32.totalorder %s14, 0
    %p234 = por %p232, %p233
    %p235 = scmp.ne.s32.totalorder %s224, %s227
    %p236 = scmp.eq.s32.totalorder %s19, 3
    %p237 = por %p235, %p236
    %p238 = scmp.ne.s32.totalorder %s227, %s228
    %p239 = scmp.eq.s32.totalorder %s19, 0
    %p240 = por %p238, %p239
    %p241 = scmp.ne.s32.totalorder %s227, %s228
    %p242 = scmp.eq.s32.totalorder %s20, 3
    %p243 = por %p241, %p242
    %p245 = scmp.ne.s32.totalorder %s228, %s244
    %p246 = scmp.eq.s32.totalorder %s20, 0
    %p247 = por %p245, %p246
    %p248 = scmp.le.s32.totalorder 1, %s14
    %p249 = scmp.lt.s32.totalorder %s14, 5
    %p250 = pnand %p248, %p249
    %p251 = pneg %p250
    // Predicated region
    $region9: #{tpu_custom_call.1} parent=5 // pred_check
      _
    $region10: #{tpu_custom_call.1} parent=5 // pred_check_branch
      %253 = sbr.rel (%p250) target = $region12
    $region11: #{tpu_custom_call.1} parent=5 // pred_region
      %s254 = ssub.s32 %s14, 1
      // Predicated region
      $region13: #{tpu_custom_call.1} parent=11 // pred_check
        %p255 = pneg %p107
      $region14: #{tpu_custom_call.1} parent=11 // pred_check_branch
        %257 = sbr.rel (%p255) target = $region16
      $region15: #{tpu_custom_call.1} parent=11 // pred_region
        _
      $region16: #{tpu_custom_call.1} parent=11 // pred_fallthru
        _
      // Predicated region
      $region17: #{tpu_custom_call.1} parent=11 // pred_check
        %p258 = pneg %p128
      $region18: #{tpu_custom_call.1} parent=11 // pred_check_branch
        %260 = sbr.rel (%p258) target = $region20
      $region19: #{tpu_custom_call.1} parent=11 // pred_region
        _
      $region20: #{tpu_custom_call.1} parent=11 // pred_fallthru
        _
      // Predicated region
      $region21: #{tpu_custom_call.1} parent=11 // pred_check
        %p261 = pneg %p149
      $region22: #{tpu_custom_call.1} parent=11 // pred_check_branch
        %263 = sbr.rel (%p261) target = $region24
      $region23: #{tpu_custom_call.1} parent=11 // pred_region
        _
      $region24: #{tpu_custom_call.1} parent=11 // pred_fallthru
        _
      // Predicated region
      $region25: #{tpu_custom_call.1} parent=11 // pred_check
        %p264 = pneg %p170
      $region26: #{tpu_custom_call.1} parent=11 // pred_check_branch
        %266 = sbr.rel (%p264) target = $region28
      $region27: #{tpu_custom_call.1} parent=11 // pred_region
        _
      $region28: #{tpu_custom_call.1} parent=11 // pred_fallthru
        _
      // Predicated region
      $region29: #{tpu_custom_call.1} parent=11 // pred_check
        %p267 = pneg %p191
      $region30: #{tpu_custom_call.1} parent=11 // pred_check_branch
        %269 = sbr.rel (%p267) target = $region32
      $region31: #{tpu_custom_call.1} parent=11 // pred_region
        _
      $region32: #{tpu_custom_call.1} parent=11 // pred_fallthru
        _
      // Predicated region
      $region33: #{tpu_custom_call.1} parent=11 // pred_check
        %p270 = pneg %p212
      $region34: #{tpu_custom_call.1} parent=11 // pred_check_branch
        %272 = sbr.rel (%p270) target = $region36
      $region35: #{tpu_custom_call.1} parent=11 // pred_region
        _
      $region36: #{tpu_custom_call.1} parent=11 // pred_fallthru
        _
    $region12: #{tpu_custom_call.1} parent=5 // pred_fallthru
      _
    %p273 = scmp.lt.s32.totalorder %s14, 4
    // Predicated region
    $region37: #{tpu_custom_call.1} parent=5 // pred_check
      %p274 = pneg %p273
    $region38: #{tpu_custom_call.1} parent=5 // pred_check_branch
      %276 = sbr.rel (%p274) target = $region40
    $region39: #{tpu_custom_call.1} parent=5 // pred_region
      // Predicated region
      $region41: #{tpu_custom_call.1} parent=39 // pred_check
        %p277 = pneg %p48
      $region42: #{tpu_custom_call.1} parent=39 // pred_check_branch
        %279 = sbr.rel (%p277) target = $region44
      $region43: #{tpu_custom_call.1} parent=39 // pred_region
        %s280 = smul.u32 8, %s22
        %s281 = ssub.s32 20, %s280
        %p282 = scmp.lt.s32.totalorder %s281, 8
        %s283 = scalar_select %p282, %s281, 8
        %s284 = smul.u32 128, %s283
        %s285 = smul.u32 %s284, 3
        %p286 = scmp.lt.s32.totalorder %s21, 1
        %s287 = scalar_select %p286, %s21, 1
        %p288 = scmp.lt.s32.totalorder %s280, 19
        %s289 = scalar_select %p288, %s280, 19
        %s290 = smul.addr %s289, 3
        %s291 = smul.addr %s287, 60
        %s292 = sadd.s32 %s290, %s291
        %s293 = smul.addr %s292, 8
        %s294 = scalar_lea.vmem %s0, %s293
        %s295 = smul.u32 8, %s22
        %s296 = ssub.s32 20, %s295
        %p297 = scmp.lt.s32.totalorder %s296, 8
        %s298 = scalar_select %p297, %s296, 8
        %s299 = smul.u32 128, %s298
        %s300 = smul.u32 %s299, 3
      $region44: #{tpu_custom_call.1} parent=39 // pred_fallthru
        _
      // Predicated region
      $region45: #{tpu_custom_call.1} parent=39 // pred_check
        %p301 = pneg %p80
      $region46: #{tpu_custom_call.1} parent=39 // pred_check_branch
        %303 = sbr.rel (%p301) target = $region48
      $region47: #{tpu_custom_call.1} parent=39 // pred_region
        %s304 = sadd.s32 %s22, 1
        %s305 = smul.u32 %s304, 2
        %s306 = smul.u32 4, %s305
        %p307 = scmp.lt.s32.totalorder %s21, 1
        %s308 = scalar_select %p307, %s21, 1
        %p309 = scmp.lt.s32.totalorder %s306, 19
        %s310 = scalar_select %p309, %s306, 19
        %s311 = smul.addr %s310, 3
        %s312 = smul.addr %s308, 60
        %s313 = sadd.s32 %s311, %s312
        %s314 = smul.addr %s313, 8
        %s315 = scalar_lea.vmem %s1, %s314
        %s316 = sadd.s32 %s22, 1
        %s317 = smul.u32 %s316, 2
        %s318 = smul.u32 4, %s317
      $region48: #{tpu_custom_call.1} parent=39 // pred_fallthru
        _
    $region40: #{tpu_custom_call.1} parent=5 // pred_fallthru
      _
    %p319 = scmp.le.s32.totalorder 1, %s14
    %p320 = scmp.lt.s32.totalorder %s14, 5
    %p321 = pnand %p319, %p320
    %p322 = pneg %p321
    // Predicated region
    $region49: #{tpu_custom_call.1} parent=5 // pred_check
      _
    $region50: #{tpu_custom_call.1} parent=5 // pred_check_branch
      %324 = sbr.rel (%p321) target = $region52
    $region51: #{tpu_custom_call.1} parent=5 // pred_region
      %s325 = ssub.s32 %s14, 1
      %s326 = smul.u32 8, %s24
      %s327 = ssub.s32 20, %s326
      %p328 = scmp.lt.s32.totalorder %s327, 8
      %s329 = scalar_select %p328, %s327, 8
      %s330 = smul.u32 128, %s329
      %s331 = smul.u32 %s330, 3
      %p332 = scmp.lt.s32.totalorder %s23, 1
      %s333 = scalar_select %p332, %s23, 1
      %p334 = scmp.lt.s32.totalorder %s326, 19
      %s335 = scalar_select %p334, %s326, 19
      %s336 = smul.addr %s335, 3
      %s337 = smul.addr %s333, 60
      %s338 = sadd.s32 %s336, %s337
      %s339 = smul.addr %s338, 8
      %s340 = scalar_lea.vmem %s0, %s339
      %p341 = pneg %p54
      %p342 = pneg %p51
      %s343 = sadd.s32 %s24, 1
      %s344 = smul.u32 %s343, 2
      %s345 = smul.u32 4, %s344
      %p346 = scmp.lt.s32.totalorder %s23, 1
      %s347 = scalar_select %p346, %s23, 1
      %p348 = scmp.lt.s32.totalorder %s345, 19
      %s349 = scalar_select %p348, %s345, 19
      %s350 = smul.addr %s349, 3
      %s351 = smul.addr %s347, 60
      %s352 = sadd.s32 %s350, %s351
      %s353 = smul.addr %s352, 8
      %s354 = scalar_lea.vmem %s1, %s353
      %p355 = pneg %p86
      %p356 = pneg %p83
      %p357 = pneg %p107
      %p358 = pneg %p104
      %p359 = pneg %p128
      %p360 = pneg %p125
      %p361 = pneg %p149
      %p362 = pneg %p146
      %p363 = pneg %p170
      %p364 = pneg %p167
      %p365 = pneg %p191
      %p366 = pneg %p188
      %p367 = pneg %p212
      %p368 = pneg %p209
      %p369 = pneg %p240
      %p370 = pneg %p237
      %s371 = smul.u32 8, %s24
      %p372 = scmp.lt.s32.totalorder %s23, 1
      %s373 = scalar_select %p372, %s23, 1
      %p374 = scmp.lt.s32.totalorder %s371, 15
      %s375 = scalar_select %p374, %s371, 15
      %s376 = smul.addr %s375, 2
      %s377 = smul.addr %s373, 32
      %s378 = sadd.s32 %s376, %s377
      %s379 = smul.addr %s378, 8
      %s380 = scalar_lea.vmem %s8, %s379
      %s381 = smul.u32 8, %s24
      %s382 = ssub.s32 20, %s381
      %p383 = scmp.lt.s32.totalorder %s382, 8
      %s384 = scalar_select %p383, %s382, 8
      %s385 = smul.u32 128, %s384
      %s386 = smul.u32 %s385, 3
      %p387 = scmp.lt.s32.totalorder %s23, 1
      %s388 = scalar_select %p387, %s23, 1
      %p389 = scmp.lt.s32.totalorder %s381, 19
      %s390 = scalar_select %p389, %s381, 19
      %s391 = smul.addr %s390, 3
      %s392 = smul.addr %s388, 60
      %s393 = sadd.s32 %s391, %s392
      %s394 = smul.addr %s393, 8
      %s395 = scalar_lea.vmem %s0, %s394
      %s396 = smul.u32 8, %s24
      %s397 = ssub.s32 20, %s396
      %p398 = scmp.lt.s32.totalorder %s397, 8
      %s399 = scalar_select %p398, %s397, 8
      %s400 = smul.u32 128, %s399
      %s401 = smul.u32 %s400, 3
      %s402 = sadd.s32 %s24, 1
      %s403 = smul.u32 %s402, 2
      %s404 = smul.u32 4, %s403
      %p405 = scmp.lt.s32.totalorder %s23, 1
      %s406 = scalar_select %p405, %s23, 1
      %p407 = scmp.lt.s32.totalorder %s404, 19
      %s408 = scalar_select %p407, %s404, 19
      %s409 = smul.addr %s408, 3
      %s410 = smul.addr %s406, 60
      %s411 = sadd.s32 %s409, %s410
      %s412 = smul.addr %s411, 8
      %s413 = scalar_lea.vmem %s1, %s412
      %s414 = sadd.s32 %s24, 1
      %s415 = smul.u32 %s414, 2
      %s416 = smul.u32 4, %s415
      %s417 = smul.u32 8, %s24
      %p418 = scmp.lt.s32.totalorder %s23, 1
      %s419 = scalar_select %p418, %s23, 1
      %p420 = scmp.lt.s32.totalorder %s417, 15
      %s421 = scalar_select %p420, %s417, 15
      %s422 = smul.addr %s421, 2
      %s423 = smul.addr %s419, 32
      %s424 = sadd.s32 %s422, %s423
      %s425 = smul.addr %s424, 8
      %s426 = scalar_lea.vmem %s8, %s425
      %s427 = smul.u32 8, %s24
      %v429 = vld [vmem:[%s395] sm:$0xff]
      %v430 = vld [vmem:[%s395 + $0x8] sm:$0xff]
      %v431 = vld [vmem:[%s395 + $0x10] sm:$0x3]
      %v432 = vld [vmem:[%s395 + $0x18] sm:$0xff]
      %v433 = vld [vmem:[%s395 + $0x20] sm:$0xff]
      %v434 = vld [vmem:[%s395 + $0x28] sm:$0x3]
      %v435 = vld [vmem:[%s395 + $0x30] sm:$0xff]
      %v436 = vld [vmem:[%s395 + $0x38] sm:$0xff]
      %v437 = vld [vmem:[%s395 + $0x40] sm:$0x3]
      %v438 = vld [vmem:[%s395 + $0x48] sm:$0xff]
      %v439 = vld [vmem:[%s395 + $0x50] sm:$0xff]
      %v440 = vld [vmem:[%s395 + $0x58] sm:$0x3]
      %v441 = vld [vmem:[%s395 + $0x60] sm:$0xff]
      %v442 = vld [vmem:[%s395 + $0x68] sm:$0xff]
      %v443 = vld [vmem:[%s395 + $0x70] sm:$0x3]
      %v444 = vld [vmem:[%s395 + $0x78] sm:$0xff]
      %v445 = vld [vmem:[%s395 + $0x80] sm:$0xff]
      %v446 = vld [vmem:[%s395 + $0x88] sm:$0x3]
      %v447 = vld [vmem:[%s395 + $0x90] sm:$0xff]
      %v448 = vld [vmem:[%s395 + $0x98] sm:$0xff]
      %v449 = vld [vmem:[%s395 + $0xa0] sm:$0x3]
      %v450 = vld [vmem:[%s395 + $0xa8] sm:$0xff]
      %v451 = vld [vmem:[%s395 + $0xb0] sm:$0xff]
      %v452 = vld [vmem:[%s395 + $0xb8] sm:$0x3]
      %v453 = vld [vmem:[%s413] sm:$0xff]
      %v454 = vld [vmem:[%s413 + $0x8] sm:$0xff]
      %v455 = vld [vmem:[%s413 + $0x10] sm:$0x3]
      %v456 = vld [vmem:[%s413 + $0x18] sm:$0xff]
      %v457 = vld [vmem:[%s413 + $0x20] sm:$0xff]
      %v458 = vld [vmem:[%s413 + $0x28] sm:$0x3]
      %v459 = vld [vmem:[%s413 + $0x30] sm:$0xff]
      %v460 = vld [vmem:[%s413 + $0x38] sm:$0xff]
      %v461 = vld [vmem:[%s413 + $0x40] sm:$0x3]
      %v462 = vld [vmem:[%s413 + $0x48] sm:$0xff]
      %v463 = vld [vmem:[%s413 + $0x50] sm:$0xff]
      %v464 = vld [vmem:[%s413 + $0x58] sm:$0x3]
      %vm495 = vcmask 1046528
      %v496 = vrot.slane %v429, 1
      %v497 = vrot.slane %v430, 1
      %v498 = vsel %vm495, %v496, %v497
      %v499 = vrot.slane %v431, 1
      %v500 = vsel %vm495, %v497, %v499
      %v501 = vrot.slane %v432, 1
      %v502 = vrot.slane %v433, 1
      %v503 = vsel %vm495, %v501, %v502
      %v504 = vrot.slane %v434, 1
      %v505 = vsel %vm495, %v502, %v504
      %v506 = vrot.slane %v435, 1
      %v507 = vrot.slane %v436, 1
      %v508 = vsel %vm495, %v506, %v507
      %v509 = vrot.slane %v437, 1
      %v510 = vsel %vm495, %v507, %v509
      %v511 = vrot.slane %v438, 1
      %v512 = vrot.slane %v439, 1
      %v513 = vsel %vm495, %v511, %v512
      %v514 = vrot.slane %v440, 1
      %v515 = vsel %vm495, %v512, %v514
      %v516 = vrot.slane %v441, 1
      %v517 = vrot.slane %v442, 1
      %v518 = vsel %vm495, %v516, %v517
      %v519 = vrot.slane %v443, 1
      %v520 = vsel %vm495, %v517, %v519
      %v521 = vrot.slane %v444, 1
      %v522 = vrot.slane %v445, 1
      %v523 = vsel %vm495, %v521, %v522
      %v524 = vrot.slane %v446, 1
      %v525 = vsel %vm495, %v522, %v524
      %v526 = vrot.slane %v447, 1
      %v527 = vrot.slane %v448, 1
      %v528 = vsel %vm495, %v526, %v527
      %v529 = vrot.slane %v449, 1
      %v530 = vsel %vm495, %v527, %v529
      %v531 = vrot.slane %v450, 1
      %v532 = vrot.slane %v451, 1
      %v533 = vsel %vm495, %v531, %v532
      %v534 = vrot.slane %v452, 1
      %v535 = vsel %vm495, %v532, %v534
      %v536 = vrot.slane %v453, 1
      %v537 = vrot.slane %v454, 1
      %v538 = vsel %vm495, %v536, %v537
      %v539 = vrot.slane %v455, 1
      %v540 = vsel %vm495, %v537, %v539
      %v541 = vrot.slane %v456, 1
      %v542 = vrot.slane %v457, 1
      %v543 = vsel %vm495, %v541, %v542
      %v544 = vrot.slane %v458, 1
      %v545 = vsel %vm495, %v542, %v544
      %546 = vrot.lane.b32.xlu0 %v498, 4
      %v547 = vpop.permute.xlu0 %546
      %548 = vrot.lane.b32.xlu0 %v500, 4
      %v549 = vpop.permute.xlu0 %548
      %550 = vrot.lane.b32.xlu0 %v503, 4
      %v551 = vpop.permute.xlu0 %550
      %552 = vrot.lane.b32.xlu0 %v505, 4
      %v553 = vpop.permute.xlu0 %552
      %554 = vrot.lane.b32.xlu0 %v508, 4
      %v555 = vpop.permute.xlu0 %554
      %556 = vrot.lane.b32.xlu0 %v510, 4
      %v557 = vpop.permute.xlu0 %556
      %558 = vrot.lane.b32.xlu0 %v513, 4
      %v559 = vpop.permute.xlu0 %558
      %560 = vrot.lane.b32.xlu0 %v515, 4
      %v561 = vpop.permute.xlu0 %560
      %562 = vrot.lane.b32.xlu0 %v518, 4
      %v563 = vpop.permute.xlu0 %562
      %564 = vrot.lane.b32.xlu0 %v520, 4
      %v565 = vpop.permute.xlu0 %564
      %566 = vrot.lane.b32.xlu0 %v523, 4
      %v567 = vpop.permute.xlu0 %566
      %568 = vrot.lane.b32.xlu0 %v525, 4
      %v569 = vpop.permute.xlu0 %568
      %570 = vrot.lane.b32.xlu0 %v528, 4
      %v571 = vpop.permute.xlu0 %570
      %572 = vrot.lane.b32.xlu0 %v530, 4
      %v573 = vpop.permute.xlu0 %572
      %574 = vrot.lane.b32.xlu0 %v533, 4
      %v575 = vpop.permute.xlu0 %574
      %576 = vrot.lane.b32.xlu0 %v535, 4
      %v577 = vpop.permute.xlu0 %576
      %578 = vrot.lane.b32.xlu0 %v538, 4
      %v579 = vpop.permute.xlu0 %578
      %580 = vrot.lane.b32.xlu0 %v540, 4
      %v581 = vpop.permute.xlu0 %580
      %582 = vrot.lane.b32.xlu0 %v543, 4
      %v583 = vpop.permute.xlu0 %582
      %584 = vrot.lane.b32.xlu0 %v545, 4
      %v585 = vpop.permute.xlu0 %584
      %vm606 = vcmask 1045504
      %v607 = vrot.slane %v429, 2
      %v608 = vrot.slane %v430, 2
      %v609 = vsel %vm606, %v607, %v608
      %v610 = vrot.slane %v431, 2
      %v611 = vsel %vm606, %v608, %v610
      %v612 = vrot.slane %v432, 2
      %v613 = vrot.slane %v433, 2
      %v614 = vsel %vm606, %v612, %v613
      %v615 = vrot.slane %v434, 2
      %v616 = vsel %vm606, %v613, %v615
      %v617 = vrot.slane %v435, 2
      %v618 = vrot.slane %v436, 2
      %v619 = vsel %vm606, %v617, %v618
      %v620 = vrot.slane %v437, 2
      %v621 = vsel %vm606, %v618, %v620
      %v622 = vrot.slane %v438, 2
      %v623 = vrot.slane %v439, 2
      %v624 = vsel %vm606, %v622, %v623
      %v625 = vrot.slane %v440, 2
      %v626 = vsel %vm606, %v623, %v625
      %v627 = vrot.slane %v441, 2
      %v628 = vrot.slane %v442, 2
      %v629 = vsel %vm606, %v627, %v628
      %v630 = vrot.slane %v443, 2
      %v631 = vsel %vm606, %v628, %v630
      %v632 = vrot.slane %v444, 2
      %v633 = vrot.slane %v445, 2
      %v634 = vsel %vm606, %v632, %v633
      %v635 = vrot.slane %v446, 2
      %v636 = vsel %vm606, %v633, %v635
      %v637 = vrot.slane %v447, 2
      %v638 = vrot.slane %v448, 2
      %v639 = vsel %vm606, %v637, %v638
      %v640 = vrot.slane %v449, 2
      %v641 = vsel %vm606, %v638, %v640
      %v642 = vrot.slane %v450, 2
      %v643 = vrot.slane %v451, 2
      %v644 = vsel %vm606, %v642, %v643
      %v645 = vrot.slane %v452, 2
      %v646 = vsel %vm606, %v643, %v645
      %v647 = vrot.slane %v453, 2
      %v648 = vrot.slane %v454, 2
      %v649 = vsel %vm606, %v647, %v648
      %v650 = vrot.slane %v455, 2
      %v651 = vsel %vm606, %v648, %v650
      %v652 = vrot.slane %v456, 2
      %v653 = vrot.slane %v457, 2
      %v654 = vsel %vm606, %v652, %v653
      %v655 = vrot.slane %v458, 2
      %v656 = vsel %vm606, %v653, %v655
      %657 = vrot.lane.b32.xlu0 %v609, 8
      %v658 = vpop.permute.xlu0 %657
      %659 = vrot.lane.b32.xlu0 %v611, 8
      %v660 = vpop.permute.xlu0 %659
      %661 = vrot.lane.b32.xlu0 %v614, 8
      %v662 = vpop.permute.xlu0 %661
      %663 = vrot.lane.b32.xlu0 %v616, 8
      %v664 = vpop.permute.xlu0 %663
      %665 = vrot.lane.b32.xlu0 %v619, 8
      %v666 = vpop.permute.xlu0 %665
      %667 = vrot.lane.b32.xlu0 %v621, 8
      %v668 = vpop.permute.xlu0 %667
      %669 = vrot.lane.b32.xlu0 %v624, 8
      %v670 = vpop.permute.xlu0 %669
      %671 = vrot.lane.b32.xlu0 %v626, 8
      %v672 = vpop.permute.xlu0 %671
      %673 = vrot.lane.b32.xlu0 %v629, 8
      %v674 = vpop.permute.xlu0 %673
      %675 = vrot.lane.b32.xlu0 %v631, 8
      %v676 = vpop.permute.xlu0 %675
      %677 = vrot.lane.b32.xlu0 %v634, 8
      %v678 = vpop.permute.xlu0 %677
      %679 = vrot.lane.b32.xlu0 %v636, 8
      %v680 = vpop.permute.xlu0 %679
      %681 = vrot.lane.b32.xlu0 %v639, 8
      %v682 = vpop.permute.xlu0 %681
      %683 = vrot.lane.b32.xlu0 %v641, 8
      %v684 = vpop.permute.xlu0 %683
      %685 = vrot.lane.b32.xlu0 %v644, 8
      %v686 = vpop.permute.xlu0 %685
      %687 = vrot.lane.b32.xlu0 %v646, 8
      %v688 = vpop.permute.xlu0 %687
      %689 = vrot.lane.b32.xlu0 %v649, 8
      %v690 = vpop.permute.xlu0 %689
      %691 = vrot.lane.b32.xlu0 %v651, 8
      %v692 = vpop.permute.xlu0 %691
      %693 = vrot.lane.b32.xlu0 %v654, 8
      %v694 = vpop.permute.xlu0 %693
      %695 = vrot.lane.b32.xlu0 %v656, 8
      %v696 = vpop.permute.xlu0 %695
      %719 = vrot.lane.b32.xlu0 %v432, 12
      %v720 = vpop.permute.xlu0 %719
      %721 = vrot.lane.b32.xlu0 %v433, 12
      %v722 = vpop.permute.xlu0 %721
      %723 = vrot.lane.b32.xlu0 %v435, 12
      %v724 = vpop.permute.xlu0 %723
      %725 = vrot.lane.b32.xlu0 %v436, 12
      %v726 = vpop.permute.xlu0 %725
      %727 = vrot.lane.b32.xlu0 %v438, 12
      %v728 = vpop.permute.xlu0 %727
      %729 = vrot.lane.b32.xlu0 %v439, 12
      %v730 = vpop.permute.xlu0 %729
      %731 = vrot.lane.b32.xlu0 %v441, 12
      %v732 = vpop.permute.xlu0 %731
      %733 = vrot.lane.b32.xlu0 %v442, 12
      %v734 = vpop.permute.xlu0 %733
      %735 = vrot.lane.b32.xlu0 %v444, 12
      %v736 = vpop.permute.xlu0 %735
      %737 = vrot.lane.b32.xlu0 %v445, 12
      %v738 = vpop.permute.xlu0 %737
      %739 = vrot.lane.b32.xlu0 %v447, 12
      %v740 = vpop.permute.xlu0 %739
      %741 = vrot.lane.b32.xlu0 %v448, 12
      %v742 = vpop.permute.xlu0 %741
      %743 = vrot.lane.b32.xlu0 %v450, 12
      %v744 = vpop.permute.xlu0 %743
      %745 = vrot.lane.b32.xlu0 %v451, 12
      %v746 = vpop.permute.xlu0 %745
      %747 = vrot.lane.b32.xlu0 %v453, 12
      %v748 = vpop.permute.xlu0 %747
      %749 = vrot.lane.b32.xlu0 %v454, 12
      %v750 = vpop.permute.xlu0 %749
      %751 = vrot.lane.b32.xlu0 %v456, 12
      %v752 = vpop.permute.xlu0 %751
      %753 = vrot.lane.b32.xlu0 %v457, 12
      %v754 = vpop.permute.xlu0 %753
      %755 = vrot.lane.b32.xlu0 %v459, 12
      %v756 = vpop.permute.xlu0 %755
      %757 = vrot.lane.b32.xlu0 %v460, 12
      %v758 = vpop.permute.xlu0 %757
      %v780 = vrot.slane %v459, 1
      %v781 = vrot.slane %v460, 1
      %v782 = vsel %vm495, %v780, %v781
      %v783 = vrot.slane %v461, 1
      %v784 = vsel %vm495, %v781, %v783
      %785 = vrot.lane.b32.xlu0 %v503, 16
      %v786 = vpop.permute.xlu0 %785
      %787 = vrot.lane.b32.xlu0 %v505, 16
      %v788 = vpop.permute.xlu0 %787
      %789 = vrot.lane.b32.xlu0 %v508, 16
      %v790 = vpop.permute.xlu0 %789
      %791 = vrot.lane.b32.xlu0 %v510, 16
      %v792 = vpop.permute.xlu0 %791
      %793 = vrot.lane.b32.xlu0 %v513, 16
      %v794 = vpop.permute.xlu0 %793
      %795 = vrot.lane.b32.xlu0 %v515, 16
      %v796 = vpop.permute.xlu0 %795
      %797 = vrot.lane.b32.xlu0 %v518, 16
      %v798 = vpop.permute.xlu0 %797
      %799 = vrot.lane.b32.xlu0 %v520, 16
      %v800 = vpop.permute.xlu0 %799
      %801 = vrot.lane.b32.xlu0 %v523, 16
      %v802 = vpop.permute.xlu0 %801
      %803 = vrot.lane.b32.xlu0 %v525, 16
      %v804 = vpop.permute.xlu0 %803
      %805 = vrot.lane.b32.xlu0 %v528, 16
      %v806 = vpop.permute.xlu0 %805
      %807 = vrot.lane.b32.xlu0 %v530, 16
      %v808 = vpop.permute.xlu0 %807
      %809 = vrot.lane.b32.xlu0 %v533, 16
      %v810 = vpop.permute.xlu0 %809
      %811 = vrot.lane.b32.xlu0 %v535, 16
      %v812 = vpop.permute.xlu0 %811
      %813 = vrot.lane.b32.xlu0 %v538, 16
      %v814 = vpop.permute.xlu0 %813
      %815 = vrot.lane.b32.xlu0 %v540, 16
      %v816 = vpop.permute.xlu0 %815
      %817 = vrot.lane.b32.xlu0 %v543, 16
      %v818 = vpop.permute.xlu0 %817
      %819 = vrot.lane.b32.xlu0 %v545, 16
      %v820 = vpop.permute.xlu0 %819
      %821 = vrot.lane.b32.xlu0 %v782, 16
      %v822 = vpop.permute.xlu0 %821
      %823 = vrot.lane.b32.xlu0 %v784, 16
      %v824 = vpop.permute.xlu0 %823
      %v845 = vrot.slane %v459, 2
      %v846 = vrot.slane %v460, 2
      %v847 = vsel %vm606, %v845, %v846
      %v848 = vrot.slane %v461, 2
      %v849 = vsel %vm606, %v846, %v848
      %850 = vrot.lane.b32.xlu0 %v614, 20
      %v851 = vpop.permute.xlu0 %850
      %852 = vrot.lane.b32.xlu0 %v616, 20
      %v853 = vpop.permute.xlu0 %852
      %854 = vrot.lane.b32.xlu0 %v619, 20
      %v855 = vpop.permute.xlu0 %854
      %856 = vrot.lane.b32.xlu0 %v621, 20
      %v857 = vpop.permute.xlu0 %856
      %858 = vrot.lane.b32.xlu0 %v624, 20
      %v859 = vpop.permute.xlu0 %858
      %860 = vrot.lane.b32.xlu0 %v626, 20
      %v861 = vpop.permute.xlu0 %860
      %862 = vrot.lane.b32.xlu0 %v629, 20
      %v863 = vpop.permute.xlu0 %862
      %864 = vrot.lane.b32.xlu0 %v631, 20
      %v865 = vpop.permute.xlu0 %864
      %866 = vrot.lane.b32.xlu0 %v634, 20
      %v867 = vpop.permute.xlu0 %866
      %868 = vrot.lane.b32.xlu0 %v636, 20
      %v869 = vpop.permute.xlu0 %868
      %870 = vrot.lane.b32.xlu0 %v639, 20
      %v871 = vpop.permute.xlu0 %870
      %872 = vrot.lane.b32.xlu0 %v641, 20
      %v873 = vpop.permute.xlu0 %872
      %874 = vrot.lane.b32.xlu0 %v644, 20
      %v875 = vpop.permute.xlu0 %874
      %876 = vrot.lane.b32.xlu0 %v646, 20
      %v877 = vpop.permute.xlu0 %876
      %878 = vrot.lane.b32.xlu0 %v649, 20
      %v879 = vpop.permute.xlu0 %878
      %880 = vrot.lane.b32.xlu0 %v651, 20
      %v881 = vpop.permute.xlu0 %880
      %882 = vrot.lane.b32.xlu0 %v654, 20
      %v883 = vpop.permute.xlu0 %882
      %884 = vrot.lane.b32.xlu0 %v656, 20
      %v885 = vpop.permute.xlu0 %884
      %886 = vrot.lane.b32.xlu0 %v847, 20
      %v887 = vpop.permute.xlu0 %886
      %888 = vrot.lane.b32.xlu0 %v849, 20
      %v889 = vpop.permute.xlu0 %888
      %912 = vrot.lane.b32.xlu0 %v435, 24
      %v913 = vpop.permute.xlu0 %912
      %914 = vrot.lane.b32.xlu0 %v436, 24
      %v915 = vpop.permute.xlu0 %914
      %916 = vrot.lane.b32.xlu0 %v438, 24
      %v917 = vpop.permute.xlu0 %916
      %918 = vrot.lane.b32.xlu0 %v439, 24
      %v919 = vpop.permute.xlu0 %918
      %920 = vrot.lane.b32.xlu0 %v441, 24
      %v921 = vpop.permute.xlu0 %920
      %922 = vrot.lane.b32.xlu0 %v442, 24
      %v923 = vpop.permute.xlu0 %922
      %924 = vrot.lane.b32.xlu0 %v444, 24
      %v925 = vpop.permute.xlu0 %924
      %926 = vrot.lane.b32.xlu0 %v445, 24
      %v927 = vpop.permute.xlu0 %926
      %928 = vrot.lane.b32.xlu0 %v447, 24
      %v929 = vpop.permute.xlu0 %928
      %930 = vrot.lane.b32.xlu0 %v448, 24
      %v931 = vpop.permute.xlu0 %930
      %932 = vrot.lane.b32.xlu0 %v450, 24
      %v933 = vpop.permute.xlu0 %932
      %934 = vrot.lane.b32.xlu0 %v451, 24
      %v935 = vpop.permute.xlu0 %934
      %936 = vrot.lane.b32.xlu0 %v453, 24
      %v937 = vpop.permute.xlu0 %936
      %938 = vrot.lane.b32.xlu0 %v454, 24
      %v939 = vpop.permute.xlu0 %938
      %940 = vrot.lane.b32.xlu0 %v456, 24
      %v941 = vpop.permute.xlu0 %940
      %942 = vrot.lane.b32.xlu0 %v457, 24
      %v943 = vpop.permute.xlu0 %942
      %944 = vrot.lane.b32.xlu0 %v459, 24
      %v945 = vpop.permute.xlu0 %944
      %946 = vrot.lane.b32.xlu0 %v460, 24
      %v947 = vpop.permute.xlu0 %946
      %948 = vrot.lane.b32.xlu0 %v462, 24
      %v949 = vpop.permute.xlu0 %948
      %950 = vrot.lane.b32.xlu0 %v463, 24
      %v951 = vpop.permute.xlu0 %950
      %v973 = vrot.slane %v462, 1
      %v974 = vrot.slane %v463, 1
      %v975 = vsel %vm495, %v973, %v974
      %v976 = vrot.slane %v464, 1
      %v977 = vsel %vm495, %v974, %v976
      %978 = vrot.lane.b32.xlu0 %v508, 28
      %v979 = vpop.permute.xlu0 %978
      %980 = vrot.lane.b32.xlu0 %v510, 28
      %v981 = vpop.permute.xlu0 %980
      %982 = vrot.lane.b32.xlu0 %v513, 28
      %v983 = vpop.permute.xlu0 %982
      %984 = vrot.lane.b32.xlu0 %v515, 28
      %v985 = vpop.permute.xlu0 %984
      %986 = vrot.lane.b32.xlu0 %v518, 28
      %v987 = vpop.permute.xlu0 %986
      %988 = vrot.lane.b32.xlu0 %v520, 28
      %v989 = vpop.permute.xlu0 %988
      %990 = vrot.lane.b32.xlu0 %v523, 28
      %v991 = vpop.permute.xlu0 %990
      %992 = vrot.lane.b32.xlu0 %v525, 28
      %v993 = vpop.permute.xlu0 %992
      %994 = vrot.lane.b32.xlu0 %v528, 28
      %v995 = vpop.permute.xlu0 %994
      %996 = vrot.lane.b32.xlu0 %v530, 28
      %v997 = vpop.permute.xlu0 %996
      %998 = vrot.lane.b32.xlu0 %v533, 28
      %v999 = vpop.permute.xlu0 %998
      %1000 = vrot.lane.b32.xlu0 %v535, 28
      %v1001 = vpop.permute.xlu0 %1000
      %1002 = vrot.lane.b32.xlu0 %v538, 28
      %v1003 = vpop.permute.xlu0 %1002
      %1004 = vrot.lane.b32.xlu0 %v540, 28
      %v1005 = vpop.permute.xlu0 %1004
      %1006 = vrot.lane.b32.xlu0 %v543, 28
      %v1007 = vpop.permute.xlu0 %1006
      %1008 = vrot.lane.b32.xlu0 %v545, 28
      %v1009 = vpop.permute.xlu0 %1008
      %1010 = vrot.lane.b32.xlu0 %v782, 28
      %v1011 = vpop.permute.xlu0 %1010
      %1012 = vrot.lane.b32.xlu0 %v784, 28
      %v1013 = vpop.permute.xlu0 %1012
      %1014 = vrot.lane.b32.xlu0 %v975, 28
      %v1015 = vpop.permute.xlu0 %1014
      %1016 = vrot.lane.b32.xlu0 %v977, 28
      %v1017 = vpop.permute.xlu0 %1016
      %v1038 = vrot.slane %v462, 2
      %v1039 = vrot.slane %v463, 2
      %v1040 = vsel %vm606, %v1038, %v1039
      %v1041 = vrot.slane %v464, 2
      %v1042 = vsel %vm606, %v1039, %v1041
      %1043 = vrot.lane.b32.xlu0 %v619, 32
      %v1044 = vpop.permute.xlu0 %1043
      %1045 = vrot.lane.b32.xlu0 %v621, 32
      %v1046 = vpop.permute.xlu0 %1045
      %1047 = vrot.lane.b32.xlu0 %v624, 32
      %v1048 = vpop.permute.xlu0 %1047
      %1049 = vrot.lane.b32.xlu0 %v626, 32
      %v1050 = vpop.permute.xlu0 %1049
      %1051 = vrot.lane.b32.xlu0 %v629, 32
      %v1052 = vpop.permute.xlu0 %1051
      %1053 = vrot.lane.b32.xlu0 %v631, 32
      %v1054 = vpop.permute.xlu0 %1053
      %1055 = vrot.lane.b32.xlu0 %v634, 32
      %v1056 = vpop.permute.xlu0 %1055
      %1057 = vrot.lane.b32.xlu0 %v636, 32
      %v1058 = vpop.permute.xlu0 %1057
      %1059 = vrot.lane.b32.xlu0 %v639, 32
      %v1060 = vpop.permute.xlu0 %1059
      %1061 = vrot.lane.b32.xlu0 %v641, 32
      %v1062 = vpop.permute.xlu0 %1061
      %1063 = vrot.lane.b32.xlu0 %v644, 32
      %v1064 = vpop.permute.xlu0 %1063
      %1065 = vrot.lane.b32.xlu0 %v646, 32
      %v1066 = vpop.permute.xlu0 %1065
      %1067 = vrot.lane.b32.xlu0 %v649, 32
      %v1068 = vpop.permute.xlu0 %1067
      %1069 = vrot.lane.b32.xlu0 %v651, 32
      %v1070 = vpop.permute.xlu0 %1069
      %1071 = vrot.lane.b32.xlu0 %v654, 32
      %v1072 = vpop.permute.xlu0 %1071
      %1073 = vrot.lane.b32.xlu0 %v656, 32
      %v1074 = vpop.permute.xlu0 %1073
      %1075 = vrot.lane.b32.xlu0 %v847, 32
      %v1076 = vpop.permute.xlu0 %1075
      %1077 = vrot.lane.b32.xlu0 %v849, 32
      %v1078 = vpop.permute.xlu0 %1077
      %1079 = vrot.lane.b32.xlu0 %v1040, 32
      %v1080 = vpop.permute.xlu0 %1079
      %1081 = vrot.lane.b32.xlu0 %v1042, 32
      %v1082 = vpop.permute.xlu0 %1081
      %vm1103 = vcmask 31744
      %v1104 = vsel %vm1103, %v429, %v547
      %v1105 = vsel %vm1103, %v430, %v549
      %v1106 = vsel %vm1103, %v432, %v551
      %v1107 = vsel %vm1103, %v433, %v553
      %v1108 = vsel %vm1103, %v435, %v555
      %v1109 = vsel %vm1103, %v436, %v557
      %v1110 = vsel %vm1103, %v438, %v559
      %v1111 = vsel %vm1103, %v439, %v561
      %v1112 = vsel %vm1103, %v441, %v563
      %v1113 = vsel %vm1103, %v442, %v565
      %v1114 = vsel %vm1103, %v444, %v567
      %v1115 = vsel %vm1103, %v445, %v569
      %v1116 = vsel %vm1103, %v447, %v571
      %v1117 = vsel %vm1103, %v448, %v573
      %v1118 = vsel %vm1103, %v450, %v575
      %v1119 = vsel %vm1103, %v451, %v577
      %v1120 = vsel %vm1103, %v453, %v579
      %v1121 = vsel %vm1103, %v454, %v581
      %v1122 = vsel %vm1103, %v456, %v583
      %v1123 = vsel %vm1103, %v457, %v585
      %vm1124 = vcmask 64512
      %v1125 = vsel %vm1124, %v1104, %v658
      %v1126 = vsel %vm1124, %v1105, %v660
      %v1127 = vsel %vm1124, %v1106, %v662
      %v1128 = vsel %vm1124, %v1107, %v664
      %v1129 = vsel %vm1124, %v1108, %v666
      %v1130 = vsel %vm1124, %v1109, %v668
      %v1131 = vsel %vm1124, %v1110, %v670
      %v1132 = vsel %vm1124, %v1111, %v672
      %v1133 = vsel %vm1124, %v1112, %v674
      %v1134 = vsel %vm1124, %v1113, %v676
      %v1135 = vsel %vm1124, %v1114, %v678
      %v1136 = vsel %vm1124, %v1115, %v680
      %v1137 = vsel %vm1124, %v1116, %v682
      %v1138 = vsel %vm1124, %v1117, %v684
      %v1139 = vsel %vm1124, %v1118, %v686
      %v1140 = vsel %vm1124, %v1119, %v688
      %v1141 = vsel %vm1124, %v1120, %v690
      %v1142 = vsel %vm1124, %v1121, %v692
      %v1143 = vsel %vm1124, %v1122, %v694
      %v1144 = vsel %vm1124, %v1123, %v696
      %vm1145 = vcmask 97280
      %v1146 = vsel %vm1145, %v1125, %v720
      %v1147 = vsel %vm1145, %v1126, %v722
      %v1148 = vsel %vm1145, %v1127, %v724
      %v1149 = vsel %vm1145, %v1128, %v726
      %v1150 = vsel %vm1145, %v1129, %v728
      %v1151 = vsel %vm1145, %v1130, %v730
      %v1152 = vsel %vm1145, %v1131, %v732
      %v1153 = vsel %vm1145, %v1132, %v734
      %v1154 = vsel %vm1145, %v1133, %v736
      %v1155 = vsel %vm1145, %v1134, %v738
      %v1156 = vsel %vm1145, %v1135, %v740
      %v1157 = vsel %vm1145, %v1136, %v742
      %v1158 = vsel %vm1145, %v1137, %v744
      %v1159 = vsel %vm1145, %v1138, %v746
      %v1160 = vsel %vm1145, %v1139, %v748
      %v1161 = vsel %vm1145, %v1140, %v750
      %v1162 = vsel %vm1145, %v1141, %v752
      %v1163 = vsel %vm1145, %v1142, %v754
      %v1164 = vsel %vm1145, %v1143, %v756
      %v1165 = vsel %vm1145, %v1144, %v758
      %vm1166 = vcmask 130048
      %v1167 = vsel %vm1166, %v1146, %v786
      %v1168 = vsel %vm1166, %v1147, %v788
      %v1169 = vsel %vm1166, %v1148, %v790
      %v1170 = vsel %vm1166, %v1149, %v792
      %v1171 = vsel %vm1166, %v1150, %v794
      %v1172 = vsel %vm1166, %v1151, %v796
      %v1173 = vsel %vm1166, %v1152, %v798
      %v1174 = vsel %vm1166, %v1153, %v800
      %v1175 = vsel %vm1166, %v1154, %v802
      %v1176 = vsel %vm1166, %v1155, %v804
      %v1177 = vsel %vm1166, %v1156, %v806
      %v1178 = vsel %vm1166, %v1157, %v808
      %v1179 = vsel %vm1166, %v1158, %v810
      %v1180 = vsel %vm1166, %v1159, %v812
      %v1181 = vsel %vm1166, %v1160, %v814
      %v1182 = vsel %vm1166, %v1161, %v816
      %v1183 = vsel %vm1166, %v1162, %v818
      %v1184 = vsel %vm1166, %v1163, %v820
      %v1185 = vsel %vm1166, %v1164, %v822
      %v1186 = vsel %vm1166, %v1165, %v824
      %vm1187 = vcmask 162816
      %v1188 = vsel %vm1187, %v1167, %v851
      %v1189 = vsel %vm1187, %v1168, %v853
      %v1190 = vsel %vm1187, %v1169, %v855
      %v1191 = vsel %vm1187, %v1170, %v857
      %v1192 = vsel %vm1187, %v1171, %v859
      %v1193 = vsel %vm1187, %v1172, %v861
      %v1194 = vsel %vm1187, %v1173, %v863
      %v1195 = vsel %vm1187, %v1174, %v865
      %v1196 = vsel %vm1187, %v1175, %v867
      %v1197 = vsel %vm1187, %v1176, %v869
      %v1198 = vsel %vm1187, %v1177, %v871
      %v1199 = vsel %vm1187, %v1178, %v873
      %v1200 = vsel %vm1187, %v1179, %v875
      %v1201 = vsel %vm1187, %v1180, %v877
      %v1202 = vsel %vm1187, %v1181, %v879
      %v1203 = vsel %vm1187, %v1182, %v881
      %v1204 = vsel %vm1187, %v1183, %v883
      %v1205 = vsel %vm1187, %v1184, %v885
      %v1206 = vsel %vm1187, %v1185, %v887
      %v1207 = vsel %vm1187, %v1186, %v889
      %vm1208 = vcmask 195584
      %v1209 = vsel %vm1208, %v1188, %v913
      %v1210 = vsel %vm1208, %v1189, %v915
      %v1211 = vsel %vm1208, %v1190, %v917
      %v1212 = vsel %vm1208, %v1191, %v919
      %v1213 = vsel %vm1208, %v1192, %v921
      %v1214 = vsel %vm1208, %v1193, %v923
      %v1215 = vsel %vm1208, %v1194, %v925
      %v1216 = vsel %vm1208, %v1195, %v927
      %v1217 = vsel %vm1208, %v1196, %v929
      %v1218 = vsel %vm1208, %v1197, %v931
      %v1219 = vsel %vm1208, %v1198, %v933
      %v1220 = vsel %vm1208, %v1199, %v935
      %v1221 = vsel %vm1208, %v1200, %v937
      %v1222 = vsel %vm1208, %v1201, %v939
      %v1223 = vsel %vm1208, %v1202, %v941
      %v1224 = vsel %vm1208, %v1203, %v943
      %v1225 = vsel %vm1208, %v1204, %v945
      %v1226 = vsel %vm1208, %v1205, %v947
      %v1227 = vsel %vm1208, %v1206, %v949
      %v1228 = vsel %vm1208, %v1207, %v951
      %vm1229 = vcmask 228352
      %v1230 = vsel %vm1229, %v1209, %v979
      %v1231 = vsel %vm1229, %v1210, %v981
      %v1232 = vsel %vm1229, %v1211, %v983
      %v1233 = vsel %vm1229, %v1212, %v985
      %v1234 = vsel %vm1229, %v1213, %v987
      %v1235 = vsel %vm1229, %v1214, %v989
      %v1236 = vsel %vm1229, %v1215, %v991
      %v1237 = vsel %vm1229, %v1216, %v993
      %v1238 = vsel %vm1229, %v1217, %v995
      %v1239 = vsel %vm1229, %v1218, %v997
      %v1240 = vsel %vm1229, %v1219, %v999
      %v1241 = vsel %vm1229, %v1220, %v1001
      %v1242 = vsel %vm1229, %v1221, %v1003
      %v1243 = vsel %vm1229, %v1222, %v1005
      %v1244 = vsel %vm1229, %v1223, %v1007
      %v1245 = vsel %vm1229, %v1224, %v1009
      %v1246 = vsel %vm1229, %v1225, %v1011
      %v1247 = vsel %vm1229, %v1226, %v1013
      %v1248 = vsel %vm1229, %v1227, %v1015
      %v1249 = vsel %vm1229, %v1228, %v1017
      %vm1250 = vcmask 261120
      %v1251 = vsel %vm1250, %v1230, %v1044
      %v1252 = vsel %vm1250, %v1231, %v1046
      %v1253 = vsel %vm1250, %v1232, %v1048
      %v1254 = vsel %vm1250, %v1233, %v1050
      %v1255 = vsel %vm1250, %v1234, %v1052
      %v1256 = vsel %vm1250, %v1235, %v1054
      %v1257 = vsel %vm1250, %v1236, %v1056
      %v1258 = vsel %vm1250, %v1237, %v1058
      %v1259 = vsel %vm1250, %v1238, %v1060
      %v1260 = vsel %vm1250, %v1239, %v1062
      %v1261 = vsel %vm1250, %v1240, %v1064
      %v1262 = vsel %vm1250, %v1241, %v1066
      %v1263 = vsel %vm1250, %v1242, %v1068
      %v1264 = vsel %vm1250, %v1243, %v1070
      %v1265 = vsel %vm1250, %v1244, %v1072
      %v1266 = vsel %vm1250, %v1245, %v1074
      %v1267 = vsel %vm1250, %v1246, %v1076
      %v1268 = vsel %vm1250, %v1247, %v1078
      %v1269 = vsel %vm1250, %v1248, %v1080
      %v1270 = vsel %vm1250, %v1249, %v1082
      %v1271 = vpack.c.bf16 %v1252, %v1251
      %v1272 = vpack.c.bf16 %v1254, %v1253
      %v1273 = vpack.c.bf16 %v1256, %v1255
      %v1274 = vpack.c.bf16 %v1258, %v1257
      %v1275 = vpack.c.bf16 %v1260, %v1259
      %v1276 = vpack.c.bf16 %v1262, %v1261
      %v1277 = vpack.c.bf16 %v1264, %v1263
      %v1278 = vpack.c.bf16 %v1266, %v1265
      %v1279 = vpack.c.bf16 %v1268, %v1267
      %v1280 = vpack.c.bf16 %v1270, %v1269
      %v1281 = vld [vmem:[%s2] sm:$0xf]
      %v1282 = vld [vmem:[%s2 + $0x4] sm:$0xf]
      %v1283 = vld [vmem:[%s2 + $0x8] sm:$0xf]
      %v1284 = vld [vmem:[%s2 + $0xc] sm:$0xf]
      %v1285 = vld [vmem:[%s2 + $0x10] sm:$0x3]
      %v1291 = vunpack.c.l.b16 %v1281
      %v1292 = vunpack.c.l.b16 %v1282
      %v1293 = vunpack.c.l.b16 %v1283
      %v1294 = vunpack.c.l.b16 %v1284
      %v1295 = vunpack.c.l.b16 %v1285
      %v1296 = vpack.c.b16 %v1292, %v1291
      %v1297 = vpack.c.b16 %v1294, %v1293
      %v1298 = vpack.c.b16 %v1295, %v1295
      %vm1301 = vcmask 293888
      %v1303 = vsel %vm1301, %v1271, 0
      %v1306 = vsel %vm1301, %v1272, 0
      %v1309 = vsel %vm1301, %v1273, 0
      %v1312 = vsel %vm1301, %v1274, 0
      %v1315 = vsel %vm1301, %v1275, 0
      %v1318 = vsel %vm1301, %v1276, 0
      %v1321 = vsel %vm1301, %v1277, 0
      %v1324 = vsel %vm1301, %v1278, 0
      %v1327 = vsel %vm1301, %v1279, 0
      %v1330 = vsel %vm1301, %v1280, 0
      %vm1332 = vcmask 1041408
      %v1334 = vsel %vm1332, %v1298, 0
      %1336 = vmatprep.subr.bf16.mxu0 0
      %1337 = vmatpush1.bf16.msra.mxu0 %v1296
      %1338 = vmatprep.subr.bf16.mxu0 0
      %1339 = vmatpush1.bf16.msra.mxu0 %v1297
      %1340 = vmatprep.subr.bf16.mxu0 0
      %1341 = vmatpush1.bf16.msra.mxu0 %v1334
      %1342 = vmatprep.subr.bf16.mxu0 0
      %1343 = vmatpush1.bf16.msra.mxu0 0
      %1344 = vmatprep.subr.bf16.mxu0 0
      %1345 = vmatpush1.bf16.msra.mxu0 0
      %1346 = vmatprep.subr.bf16.mxu0 0
      %1347 = vmatpush1.bf16.msra.mxu0 0
      %1348 = vmatprep.subr.bf16.mxu0 0
      %1349 = vmatpush1.bf16.msra.mxu0 0
      %1350 = vmatprep.subr.bf16.mxu0 0
      %1351 = vmatpush1.bf16.msra.mxu0 0
      %1352 = vmatprep.subr.bf16.mxu0 0
      %1353 = vmatpush1.bf16.msra.mxu0 0
      %1354 = vmatprep.subr.bf16.mxu0 0
      %1355 = vmatpush1.bf16.msra.mxu0 0
      %1356 = vmatprep.subr.bf16.mxu0 0
      %1357 = vmatpush1.bf16.msra.mxu0 0
      %1358 = vmatprep.subr.bf16.mxu0 0
      %1359 = vmatpush1.bf16.msra.mxu0 0
      %1360 = vmatprep.subr.bf16.mxu0 0
      %1361 = vmatpush1.bf16.msra.mxu0 0
      %1362 = vmatprep.subr.bf16.mxu0 0
      %1363 = vmatpush1.bf16.msra.mxu0 0
      %1364 = vmatprep.subr.bf16.mxu0 0
      %1365 = vmatpush1.bf16.msra.mxu0 0
      %1366 = vmatprep.subr.bf16.mxu0 0
      %1367 = vmatpush1.bf16.msra.mxu0 0
      %1368 = vmatprep.mubr.bf16.mxu0 0
      %1369 = vmatmul.mubr.bf16.gmra.mrb[0].mxu0 %v1303
      %v1370 = vpop.f32.mrb[0].mxu0
      %v1371 = vadd.f32 0.0, %v1370
      %v1372 = vpop.f32.mrb[0].mxu0
      %v1373 = vpop.f32.mrb[0].mxu0
      %v1374 = vadd.f32 0.0, %v1373
      %v1375 = vpop.f32.mrb[0].mxu0
      %1376 = vmatprep.mubr.bf16.mxu0 0
      %1377 = vmatmul.mubr.bf16.gmra.mrb[0].mxu0 %v1306
      %v1378 = vpop.f32.mrb[0].mxu0
      %v1379 = vadd.f32 0.0, %v1378
      %v1380 = vpop.f32.mrb[0].mxu0
      %v1381 = vpop.f32.mrb[0].mxu0
      %v1382 = vadd.f32 0.0, %v1381
      %v1383 = vpop.f32.mrb[0].mxu0
      %1384 = vmatprep.mubr.bf16.mxu0 0
      %1385 = vmatmul.mubr.bf16.gmra.mrb[0].mxu0 %v1309
      %v1386 = vpop.f32.mrb[0].mxu0
      %v1387 = vadd.f32 0.0, %v1386
      %v1388 = vpop.f32.mrb[0].mxu0
      %v1389 = vpop.f32.mrb[0].mxu0
      %v1390 = vadd.f32 0.0, %v1389
      %v1391 = vpop.f32.mrb[0].mxu0
      %1392 = vmatprep.mubr.bf16.mxu0 0
      %1393 = vmatmul.mubr.bf16.gmra.mrb[0].mxu0 %v1312
      %v1394 = vpop.f32.mrb[0].mxu0
      %v1395 = vadd.f32 0.0, %v1394
      %v1396 = vpop.f32.mrb[0].mxu0
      %v1397 = vpop.f32.mrb[0].mxu0
      %v1398 = vadd.f32 0.0, %v1397
      %v1399 = vpop.f32.mrb[0].mxu0
      %1400 = vmatprep.mubr.bf16.mxu0 0
      %1401 = vmatmul.mubr.bf16.gmra.mrb[0].mxu0 %v1315
      %v1402 = vpop.f32.mrb[0].mxu0
      %v1403 = vadd.f32 0.0, %v1402
      %v1404 = vpop.f32.mrb[0].mxu0
      %v1405 = vpop.f32.mrb[0].mxu0
      %v1406 = vadd.f32 0.0, %v1405
      %v1407 = vpop.f32.mrb[0].mxu0
      %1408 = vmatprep.mubr.bf16.mxu0 0
      %1409 = vmatmul.mubr.bf16.gmra.mrb[0].mxu0 %v1318
      %v1410 = vpop.f32.mrb[0].mxu0
      %v1411 = vadd.f32 0.0, %v1410
      %v1412 = vpop.f32.mrb[0].mxu0
      %v1413 = vpop.f32.mrb[0].mxu0
      %v1414 = vadd.f32 0.0, %v1413
      %v1415 = vpop.f32.mrb[0].mxu0
      %1416 = vmatprep.mubr.bf16.mxu0 0
      %1417 = vmatmul.mubr.bf16.gmra.mrb[0].mxu0 %v1321
      %v1418 = vpop.f32.mrb[0].mxu0
      %v1419 = vadd.f32 0.0, %v1418
      %v1420 = vpop.f32.mrb[0].mxu0
      %v1421 = vpop.f32.mrb[0].mxu0
      %v1422 = vadd.f32 0.0, %v1421
      %v1423 = vpop.f32.mrb[0].mxu0
      %1424 = vmatprep.mubr.bf16.mxu0 0
      %1425 = vmatmul.mubr.bf16.gmra.mrb[0].mxu0 %v1324
      %v1426 = vpop.f32.mrb[0].mxu0
      %v1427 = vadd.f32 0.0, %v1426
      %v1428 = vpop.f32.mrb[0].mxu0
      %v1429 = vpop.f32.mrb[0].mxu0
      %v1430 = vadd.f32 0.0, %v1429
      %v1431 = vpop.f32.mrb[0].mxu0
      %1432 = vmatprep.mubr.bf16.mxu0 0
      %1433 = vmatmul.mubr.bf16.gmra.mrb[0].mxu0 %v1327
      %v1434 = vpop.f32.mrb[0].mxu0
      %v1435 = vadd.f32 0.0, %v1434
      %v1436 = vpop.f32.mrb[0].mxu0
      %v1437 = vpop.f32.mrb[0].mxu0
      %v1438 = vadd.f32 0.0, %v1437
      %v1439 = vpop.f32.mrb[0].mxu0
      %1440 = vmatprep.mubr.bf16.mxu0 0
      %1441 = vmatmul.mubr.bf16.gmra.mrb[0].mxu0 %v1330
      %v1442 = vpop.f32.mrb[0].mxu0
      %v1443 = vadd.f32 0.0, %v1442
      %v1444 = vpop.f32.mrb[0].mxu0
      %v1445 = vpop.f32.mrb[0].mxu0
      %v1446 = vadd.f32 0.0, %v1445
      %v1447 = vpop.f32.mrb[0].mxu0
      %1448 = vdwg.mxu0
      %v1449 = vld [vmem:[%s3] sm:$0x1]
      %v1451 = vlaneseq
      %v1452 = vshrl.u32 %v1451, 7
      %v1453 = vsub.s32 0, %v1452
      %v1454 = vrot.slane %v1449, %v1453
      %v1456 = vmul.f32 %v1371, %v1454
      %v1457 = vmul.f32 %v1374, %v1454
      %v1458 = vmul.f32 %v1379, %v1454
      %v1459 = vmul.f32 %v1382, %v1454
      %v1460 = vmul.f32 %v1387, %v1454
      %v1461 = vmul.f32 %v1390, %v1454
      %v1462 = vmul.f32 %v1395, %v1454
      %v1463 = vmul.f32 %v1398, %v1454
      %v1464 = vmul.f32 %v1403, %v1454
      %v1465 = vmul.f32 %v1406, %v1454
      %v1466 = vmul.f32 %v1411, %v1454
      %v1467 = vmul.f32 %v1414, %v1454
      %v1468 = vmul.f32 %v1419, %v1454
      %v1469 = vmul.f32 %v1422, %v1454
      %v1470 = vmul.f32 %v1427, %v1454
      %v1471 = vmul.f32 %v1430, %v1454
      %v1472 = vmul.f32 %v1435, %v1454
      %v1473 = vmul.f32 %v1438, %v1454
      %v1474 = vmul.f32 %v1443, %v1454
      %v1475 = vmul.f32 %v1446, %v1454
      %v1476 = vld [vmem:[%s4] sm:$0x1]
      %v1478 = vlaneseq
      %v1479 = vshrl.u32 %v1478, 7
      %v1480 = vsub.s32 0, %v1479
      %v1481 = vrot.slane %v1476, %v1480
      %v1483 = vadd.f32 %v1456, %v1481
      %v1484 = vadd.f32 %v1457, %v1481
      %v1485 = vadd.f32 %v1458, %v1481
      %v1486 = vadd.f32 %v1459, %v1481
      %v1487 = vadd.f32 %v1460, %v1481
      %v1488 = vadd.f32 %v1461, %v1481
      %v1489 = vadd.f32 %v1462, %v1481
      %v1490 = vadd.f32 %v1463, %v1481
      %v1491 = vadd.f32 %v1464, %v1481
      %v1492 = vadd.f32 %v1465, %v1481
      %v1493 = vadd.f32 %v1466, %v1481
      %v1494 = vadd.f32 %v1467, %v1481
      %v1495 = vadd.f32 %v1468, %v1481
      %v1496 = vadd.f32 %v1469, %v1481
      %v1497 = vadd.f32 %v1470, %v1481
      %v1498 = vadd.f32 %v1471, %v1481
      %v1499 = vadd.f32 %v1472, %v1481
      %v1500 = vadd.f32 %v1473, %v1481
      %v1501 = vadd.f32 %v1474, %v1481
      %v1502 = vadd.f32 %v1475, %v1481
      %v1503 = vxor.u32 %v1483, 2147483648
      %v1504 = vxor.u32 %v1484, 2147483648
      %v1505 = vxor.u32 %v1485, 2147483648
      %v1506 = vxor.u32 %v1486, 2147483648
      %v1507 = vxor.u32 %v1487, 2147483648
      %v1508 = vxor.u32 %v1488, 2147483648
      %v1509 = vxor.u32 %v1489, 2147483648
      %v1510 = vxor.u32 %v1490, 2147483648
      %v1511 = vxor.u32 %v1491, 2147483648
      %v1512 = vxor.u32 %v1492, 2147483648
      %v1513 = vxor.u32 %v1493, 2147483648
      %v1514 = vxor.u32 %v1494, 2147483648
      %v1515 = vxor.u32 %v1495, 2147483648
      %v1516 = vxor.u32 %v1496, 2147483648
      %v1517 = vxor.u32 %v1497, 2147483648
      %v1518 = vxor.u32 %v1498, 2147483648
      %v1519 = vxor.u32 %v1499, 2147483648
      %v1520 = vxor.u32 %v1500, 2147483648
      %v1521 = vxor.u32 %v1501, 2147483648
      %v1522 = vxor.u32 %v1502, 2147483648
      %v1523 = vmul.f32 %v1503, 1.442695
      %v1524 = vpow.pop %v1523
      %v1525 = vmul.f32 %v1504, 1.442695
      %v1526 = vpow.pop %v1525
      %v1527 = vmul.f32 %v1505, 1.442695
      %v1528 = vpow.pop %v1527
      %v1529 = vmul.f32 %v1506, 1.442695
      %v1530 = vpow.pop %v1529
      %v1531 = vmul.f32 %v1507, 1.442695
      %v1532 = vpow.pop %v1531
      %v1533 = vmul.f32 %v1508, 1.442695
      %v1534 = vpow.pop %v1533
      %v1535 = vmul.f32 %v1509, 1.442695
      %v1536 = vpow.pop %v1535
      %v1537 = vmul.f32 %v1510, 1.442695
      %v1538 = vpow.pop %v1537
      %v1539 = vmul.f32 %v1511, 1.442695
      %v1540 = vpow.pop %v1539
      %v1541 = vmul.f32 %v1512, 1.442695
      %v1542 = vpow.pop %v1541
      %v1543 = vmul.f32 %v1513, 1.442695
      %v1544 = vpow.pop %v1543
      %v1545 = vmul.f32 %v1514, 1.442695
      %v1546 = vpow.pop %v1545
      %v1547 = vmul.f32 %v1515, 1.442695
      %v1548 = vpow.pop %v1547
      %v1549 = vmul.f32 %v1516, 1.442695
      %v1550 = vpow.pop %v1549
      %v1551 = vmul.f32 %v1517, 1.442695
      %v1552 = vpow.pop %v1551
      %v1553 = vmul.f32 %v1518, 1.442695
      %v1554 = vpow.pop %v1553
      %v1555 = vmul.f32 %v1519, 1.442695
      %v1556 = vpow.pop %v1555
      %v1557 = vmul.f32 %v1520, 1.442695
      %v1558 = vpow.pop %v1557
      %v1559 = vmul.f32 %v1521, 1.442695
      %v1560 = vpow.pop %v1559
      %v1561 = vmul.f32 %v1522, 1.442695
      %v1562 = vpow.pop %v1561
      %v1563 = vadd.f32 %v1524, 1.0
      %v1564 = vadd.f32 %v1526, 1.0
      %v1565 = vadd.f32 %v1528, 1.0
      %v1566 = vadd.f32 %v1530, 1.0
      %v1567 = vadd.f32 %v1532, 1.0
      %v1568 = vadd.f32 %v1534, 1.0
      %v1569 = vadd.f32 %v1536, 1.0
      %v1570 = vadd.f32 %v1538, 1.0
      %v1571 = vadd.f32 %v1540, 1.0
      %v1572 = vadd.f32 %v1542, 1.0
      %v1573 = vadd.f32 %v1544, 1.0
      %v1574 = vadd.f32 %v1546, 1.0
      %v1575 = vadd.f32 %v1548, 1.0
      %v1576 = vadd.f32 %v1550, 1.0
      %v1577 = vadd.f32 %v1552, 1.0
      %v1578 = vadd.f32 %v1554, 1.0
      %v1579 = vadd.f32 %v1556, 1.0
      %v1580 = vadd.f32 %v1558, 1.0
      %v1581 = vadd.f32 %v1560, 1.0
      %v1582 = vadd.f32 %v1562, 1.0
      %v1583 = vrcp.pop %v1563
      %v1584 = vmul.f32 1.0, %v1583
      %v1585 = vrcp.pop %v1564
      %v1586 = vmul.f32 1.0, %v1585
      %v1587 = vrcp.pop %v1565
      %v1588 = vmul.f32 1.0, %v1587
      %v1589 = vrcp.pop %v1566
      %v1590 = vmul.f32 1.0, %v1589
      %v1591 = vrcp.pop %v1567
      %v1592 = vmul.f32 1.0, %v1591
      %v1593 = vrcp.pop %v1568
      %v1594 = vmul.f32 1.0, %v1593
      %v1595 = vrcp.pop %v1569
      %v1596 = vmul.f32 1.0, %v1595
      %v1597 = vrcp.pop %v1570
      %v1598 = vmul.f32 1.0, %v1597
      %v1599 = vrcp.pop %v1571
      %v1600 = vmul.f32 1.0, %v1599
      %v1601 = vrcp.pop %v1572
      %v1602 = vmul.f32 1.0, %v1601
      %v1603 = vrcp.pop %v1573
      %v1604 = vmul.f32 1.0, %v1603
      %v1605 = vrcp.pop %v1574
      %v1606 = vmul.f32 1.0, %v1605
      %v1607 = vrcp.pop %v1575
      %v1608 = vmul.f32 1.0, %v1607
      %v1609 = vrcp.pop %v1576
      %v1610 = vmul.f32 1.0, %v1609
      %v1611 = vrcp.pop %v1577
      %v1612 = vmul.f32 1.0, %v1611
      %v1613 = vrcp.pop %v1578
      %v1614 = vmul.f32 1.0, %v1613
      %v1615 = vrcp.pop %v1579
      %v1616 = vmul.f32 1.0, %v1615
      %v1617 = vrcp.pop %v1580
      %v1618 = vmul.f32 1.0, %v1617
      %v1619 = vrcp.pop %v1581
      %v1620 = vmul.f32 1.0, %v1619
      %v1621 = vrcp.pop %v1582
      %v1622 = vmul.f32 1.0, %v1621
      %v1623 = vmul.f32 %v1483, %v1584
      %v1624 = vmul.f32 %v1484, %v1586
      %v1625 = vmul.f32 %v1485, %v1588
      %v1626 = vmul.f32 %v1486, %v1590
      %v1627 = vmul.f32 %v1487, %v1592
      %v1628 = vmul.f32 %v1488, %v1594
      %v1629 = vmul.f32 %v1489, %v1596
      %v1630 = vmul.f32 %v1490, %v1598
      %v1631 = vmul.f32 %v1491, %v1600
      %v1632 = vmul.f32 %v1492, %v1602
      %v1633 = vmul.f32 %v1493, %v1604
      %v1634 = vmul.f32 %v1494, %v1606
      %v1635 = vmul.f32 %v1495, %v1608
      %v1636 = vmul.f32 %v1496, %v1610
      %v1637 = vmul.f32 %v1497, %v1612
      %v1638 = vmul.f32 %v1498, %v1614
      %v1639 = vmul.f32 %v1499, %v1616
      %v1640 = vmul.f32 %v1500, %v1618
      %v1641 = vmul.f32 %v1501, %v1620
      %v1642 = vmul.f32 %v1502, %v1622
      %p1643 = scmp.eq.s32.totalorder %s24, 0
      %s1644 = scalar_select %p1643, 1, 0
      %v1645 = vstv %s1644
      %vm1646 = vcmp.eq.s32.totalorder %v1645, 1
      %p1647 = scmp.eq.s32.totalorder %s24, 1
      %s1648 = scalar_select %p1647, 1, 0
      %v1649 = vstv %s1648
      %vm1650 = vcmp.eq.s32.totalorder %v1649, 1
      %v1651 = vsel %vm1646, 1, 0
      %v1652 = vsel %vm1650, 1, 0
      %vm1653 = vcmp.eq.s32.totalorder %v1651, 1
      %vm1654 = vcmp.eq.s32.totalorder %v1652, 1
      %v1655 = vsel %vm1653, 0.0, %v1623
      %v1656 = vsel %vm1653, 0.0, %v1624
      %v1657 = vsel 0, 0.0, %v1625
      %v1658 = vsel 0, 0.0, %v1626
      %v1659 = vsel 0, 0.0, %v1627
      %v1660 = vsel 0, 0.0, %v1628
      %v1661 = vsel 0, 0.0, %v1629
      %v1662 = vsel 0, 0.0, %v1630
      %v1663 = vsel 0, 0.0, %v1631
      %v1664 = vsel 0, 0.0, %v1632
      %v1665 = vsel 0, 0.0, %v1633
      %v1666 = vsel 0, 0.0, %v1634
      %v1667 = vsel 0, 0.0, %v1635
      %v1668 = vsel 0, 0.0, %v1636
      %v1669 = vsel 0, 0.0, %v1637
      %v1670 = vsel 0, 0.0, %v1638
      %v1671 = vsel 0, 0.0, %v1639
      %v1672 = vsel 0, 0.0, %v1640
      %v1673 = vsel %vm1654, 0.0, %v1641
      %v1674 = vsel %vm1654, 0.0, %v1642
      %vm1695 = vcmask 1040384
      %v1696 = vrot.slane %v1655, 7
      %v1697 = vrot.slane %v1656, 7
      %v1698 = vsel %vm1695, %v1696, %v1697
      %v1699 = vrot.slane %v1657, 7
      %v1700 = vrot.slane %v1658, 7
      %v1701 = vsel %vm1695, %v1699, %v1700
      %v1702 = vrot.slane %v1659, 7
      %v1703 = vrot.slane %v1660, 7
      %v1704 = vsel %vm1695, %v1702, %v1703
      %v1705 = vrot.slane %v1661, 7
      %v1706 = vrot.slane %v1662, 7
      %v1707 = vsel %vm1695, %v1705, %v1706
      %v1708 = vrot.slane %v1663, 7
      %v1709 = vrot.slane %v1664, 7
      %v1710 = vsel %vm1695, %v1708, %v1709
      %v1711 = vrot.slane %v1665, 7
      %v1712 = vrot.slane %v1666, 7
      %v1713 = vsel %vm1695, %v1711, %v1712
      %v1714 = vrot.slane %v1667, 7
      %v1715 = vrot.slane %v1668, 7
      %v1716 = vsel %vm1695, %v1714, %v1715
      %v1717 = vrot.slane %v1669, 7
      %v1718 = vrot.slane %v1670, 7
      %v1719 = vsel %vm1695, %v1717, %v1718
      %v1720 = vrot.slane %v1671, 7
      %v1721 = vrot.slane %v1672, 7
      %v1722 = vsel %vm1695, %v1720, %v1721
      %v1723 = vrot.slane %v1673, 7
      %v1724 = vrot.slane %v1674, 7
      %v1725 = vsel %vm1695, %v1723, %v1724
      %v1754 = vsel %vm1695, 0.0, %v1696
      %v1755 = vsel %vm1695, 0.0, %v1699
      %v1756 = vsel %vm1695, 0.0, %v1702
      %v1757 = vsel %vm1695, 0.0, %v1705
      %v1758 = vsel %vm1695, 0.0, %v1708
      %v1759 = vsel %vm1695, 0.0, %v1711
      %v1760 = vsel %vm1695, 0.0, %v1714
      %v1761 = vsel %vm1695, 0.0, %v1717
      %v1762 = vsel %vm1695, 0.0, %v1720
      %v1763 = vsel %vm1695, 0.0, %v1723
      %v1764 = vsel %vm1695, %v1697, 0.0
      %v1765 = vsel %vm1695, %v1700, 0.0
      %v1766 = vsel %vm1695, %v1703, 0.0
      %v1767 = vsel %vm1695, %v1706, 0.0
      %v1768 = vsel %vm1695, %v1709, 0.0
      %v1769 = vsel %vm1695, %v1712, 0.0
      %v1770 = vsel %vm1695, %v1715, 0.0
      %v1771 = vsel %vm1695, %v1718, 0.0
      %v1772 = vsel %vm1695, %v1721, 0.0
      %v1773 = vsel %vm1695, %v1724, 0.0
      %v1790 = vrot.slane %v1754, 1
      %v1791 = vrot.slane %v1698, 1
      %v1792 = vsel %vm495, %v1790, %v1791
      %v1793 = vrot.slane %v1764, 1
      %v1794 = vsel %vm495, %v1791, %v1793
      %v1795 = vrot.slane %v1755, 1
      %v1796 = vrot.slane %v1701, 1
      %v1797 = vsel %vm495, %v1795, %v1796
      %v1798 = vrot.slane %v1765, 1
      %v1799 = vsel %vm495, %v1796, %v1798
      %v1800 = vrot.slane %v1756, 1
      %v1801 = vrot.slane %v1704, 1
      %v1802 = vsel %vm495, %v1800, %v1801
      %v1803 = vrot.slane %v1766, 1
      %v1804 = vsel %vm495, %v1801, %v1803
      %v1805 = vrot.slane %v1757, 1
      %v1806 = vrot.slane %v1707, 1
      %v1807 = vsel %vm495, %v1805, %v1806
      %v1808 = vrot.slane %v1767, 1
      %v1809 = vsel %vm495, %v1806, %v1808
      %v1810 = vrot.slane %v1758, 1
      %v1811 = vrot.slane %v1710, 1
      %v1812 = vsel %vm495, %v1810, %v1811
      %v1813 = vrot.slane %v1768, 1
      %v1814 = vsel %vm495, %v1811, %v1813
      %v1815 = vrot.slane %v1759, 1
      %v1816 = vrot.slane %v1713, 1
      %v1817 = vsel %vm495, %v1815, %v1816
      %v1818 = vrot.slane %v1769, 1
      %v1819 = vsel %vm495, %v1816, %v1818
      %v1820 = vrot.slane %v1760, 1
      %v1821 = vrot.slane %v1716, 1
      %v1822 = vsel %vm495, %v1820, %v1821
      %v1823 = vrot.slane %v1770, 1
      %v1824 = vsel %vm495, %v1821, %v1823
      %v1825 = vrot.slane %v1761, 1
      %v1826 = vrot.slane %v1719, 1
      %v1827 = vsel %vm495, %v1825, %v1826
      %v1828 = vrot.slane %v1771, 1
      %v1829 = vsel %vm495, %v1826, %v1828
      %1830 = vrot.lane.b32.xlu0 %v1792, 8
      %v1831 = vpop.permute.xlu0 %1830
      %1832 = vrot.lane.b32.xlu0 %v1794, 8
      %v1833 = vpop.permute.xlu0 %1832
      %1834 = vrot.lane.b32.xlu0 %v1797, 8
      %v1835 = vpop.permute.xlu0 %1834
      %1836 = vrot.lane.b32.xlu0 %v1799, 8
      %v1837 = vpop.permute.xlu0 %1836
      %1838 = vrot.lane.b32.xlu0 %v1802, 8
      %v1839 = vpop.permute.xlu0 %1838
      %1840 = vrot.lane.b32.xlu0 %v1804, 8
      %v1841 = vpop.permute.xlu0 %1840
      %1842 = vrot.lane.b32.xlu0 %v1807, 8
      %v1843 = vpop.permute.xlu0 %1842
      %1844 = vrot.lane.b32.xlu0 %v1809, 8
      %v1845 = vpop.permute.xlu0 %1844
      %1846 = vrot.lane.b32.xlu0 %v1812, 8
      %v1847 = vpop.permute.xlu0 %1846
      %1848 = vrot.lane.b32.xlu0 %v1814, 8
      %v1849 = vpop.permute.xlu0 %1848
      %1850 = vrot.lane.b32.xlu0 %v1817, 8
      %v1851 = vpop.permute.xlu0 %1850
      %1852 = vrot.lane.b32.xlu0 %v1819, 8
      %v1853 = vpop.permute.xlu0 %1852
      %1854 = vrot.lane.b32.xlu0 %v1822, 8
      %v1855 = vpop.permute.xlu0 %1854
      %1856 = vrot.lane.b32.xlu0 %v1824, 8
      %v1857 = vpop.permute.xlu0 %1856
      %1858 = vrot.lane.b32.xlu0 %v1827, 8
      %v1859 = vpop.permute.xlu0 %1858
      %1860 = vrot.lane.b32.xlu0 %v1829, 8
      %v1861 = vpop.permute.xlu0 %1860
      %v1878 = vrot.slane %v1754, 2
      %v1879 = vrot.slane %v1698, 2
      %v1880 = vsel %vm606, %v1878, %v1879
      %v1881 = vrot.slane %v1764, 2
      %v1882 = vsel %vm606, %v1879, %v1881
      %v1883 = vrot.slane %v1755, 2
      %v1884 = vrot.slane %v1701, 2
      %v1885 = vsel %vm606, %v1883, %v1884
      %v1886 = vrot.slane %v1765, 2
      %v1887 = vsel %vm606, %v1884, %v1886
      %v1888 = vrot.slane %v1756, 2
      %v1889 = vrot.slane %v1704, 2
      %v1890 = vsel %vm606, %v1888, %v1889
      %v1891 = vrot.slane %v1766, 2
      %v1892 = vsel %vm606, %v1889, %v1891
      %v1893 = vrot.slane %v1757, 2
      %v1894 = vrot.slane %v1707, 2
      %v1895 = vsel %vm606, %v1893, %v1894
      %v1896 = vrot.slane %v1767, 2
      %v1897 = vsel %vm606, %v1894, %v1896
      %v1898 = vrot.slane %v1758, 2
      %v1899 = vrot.slane %v1710, 2
      %v1900 = vsel %vm606, %v1898, %v1899
      %v1901 = vrot.slane %v1768, 2
      %v1902 = vsel %vm606, %v1899, %v1901
      %v1903 = vrot.slane %v1759, 2
      %v1904 = vrot.slane %v1713, 2
      %v1905 = vsel %vm606, %v1903, %v1904
      %v1906 = vrot.slane %v1769, 2
      %v1907 = vsel %vm606, %v1904, %v1906
      %v1908 = vrot.slane %v1760, 2
      %v1909 = vrot.slane %v1716, 2
      %v1910 = vsel %vm606, %v1908, %v1909
      %v1911 = vrot.slane %v1770, 2
      %v1912 = vsel %vm606, %v1909, %v1911
      %v1913 = vrot.slane %v1761, 2
      %v1914 = vrot.slane %v1719, 2
      %v1915 = vsel %vm606, %v1913, %v1914
      %v1916 = vrot.slane %v1771, 2
      %v1917 = vsel %vm606, %v1914, %v1916
      %1918 = vrot.lane.b32.xlu0 %v1880, 16
      %v1919 = vpop.permute.xlu0 %1918
      %1920 = vrot.lane.b32.xlu0 %v1882, 16
      %v1921 = vpop.permute.xlu0 %1920
      %1922 = vrot.lane.b32.xlu0 %v1885, 16
      %v1923 = vpop.permute.xlu0 %1922
      %1924 = vrot.lane.b32.xlu0 %v1887, 16
      %v1925 = vpop.permute.xlu0 %1924
      %1926 = vrot.lane.b32.xlu0 %v1890, 16
      %v1927 = vpop.permute.xlu0 %1926
      %1928 = vrot.lane.b32.xlu0 %v1892, 16
      %v1929 = vpop.permute.xlu0 %1928
      %1930 = vrot.lane.b32.xlu0 %v1895, 16
      %v1931 = vpop.permute.xlu0 %1930
      %1932 = vrot.lane.b32.xlu0 %v1897, 16
      %v1933 = vpop.permute.xlu0 %1932
      %1934 = vrot.lane.b32.xlu0 %v1900, 16
      %v1935 = vpop.permute.xlu0 %1934
      %1936 = vrot.lane.b32.xlu0 %v1902, 16
      %v1937 = vpop.permute.xlu0 %1936
      %1938 = vrot.lane.b32.xlu0 %v1905, 16
      %v1939 = vpop.permute.xlu0 %1938
      %1940 = vrot.lane.b32.xlu0 %v1907, 16
      %v1941 = vpop.permute.xlu0 %1940
      %1942 = vrot.lane.b32.xlu0 %v1910, 16
      %v1943 = vpop.permute.xlu0 %1942
      %1944 = vrot.lane.b32.xlu0 %v1912, 16
      %v1945 = vpop.permute.xlu0 %1944
      %1946 = vrot.lane.b32.xlu0 %v1915, 16
      %v1947 = vpop.permute.xlu0 %1946
      %1948 = vrot.lane.b32.xlu0 %v1917, 16
      %v1949 = vpop.permute.xlu0 %1948
      %1967 = vrot.lane.b32.xlu0 %v1755, 24
      %v1968 = vpop.permute.xlu0 %1967
      %1969 = vrot.lane.b32.xlu0 %v1701, 24
      %v1970 = vpop.permute.xlu0 %1969
      %1971 = vrot.lane.b32.xlu0 %v1756, 24
      %v1972 = vpop.permute.xlu0 %1971
      %1973 = vrot.lane.b32.xlu0 %v1704, 24
      %v1974 = vpop.permute.xlu0 %1973
      %1975 = vrot.lane.b32.xlu0 %v1757, 24
      %v1976 = vpop.permute.xlu0 %1975
      %1977 = vrot.lane.b32.xlu0 %v1707, 24
      %v1978 = vpop.permute.xlu0 %1977
      %1979 = vrot.lane.b32.xlu0 %v1758, 24
      %v1980 = vpop.permute.xlu0 %1979
      %1981 = vrot.lane.b32.xlu0 %v1710, 24
      %v1982 = vpop.permute.xlu0 %1981
      %1983 = vrot.lane.b32.xlu0 %v1759, 24
      %v1984 = vpop.permute.xlu0 %1983
      %1985 = vrot.lane.b32.xlu0 %v1713, 24
      %v1986 = vpop.permute.xlu0 %1985
      %1987 = vrot.lane.b32.xlu0 %v1760, 24
      %v1988 = vpop.permute.xlu0 %1987
      %1989 = vrot.lane.b32.xlu0 %v1716, 24
      %v1990 = vpop.permute.xlu0 %1989
      %1991 = vrot.lane.b32.xlu0 %v1761, 24
      %v1992 = vpop.permute.xlu0 %1991
      %1993 = vrot.lane.b32.xlu0 %v1719, 24
      %v1994 = vpop.permute.xlu0 %1993
      %1995 = vrot.lane.b32.xlu0 %v1762, 24
      %v1996 = vpop.permute.xlu0 %1995
      %1997 = vrot.lane.b32.xlu0 %v1722, 24
      %v1998 = vpop.permute.xlu0 %1997
      %v2016 = vrot.slane %v1762, 1
      %v2017 = vrot.slane %v1722, 1
      %v2018 = vsel %vm495, %v2016, %v2017
      %v2019 = vrot.slane %v1772, 1
      %v2020 = vsel %vm495, %v2017, %v2019
      %2021 = vrot.lane.b32.xlu0 %v1797, 32
      %v2022 = vpop.permute.xlu0 %2021
      %2023 = vrot.lane.b32.xlu0 %v1799, 32
      %v2024 = vpop.permute.xlu0 %2023
      %2025 = vrot.lane.b32.xlu0 %v1802, 32
      %v2026 = vpop.permute.xlu0 %2025
      %2027 = vrot.lane.b32.xlu0 %v1804, 32
      %v2028 = vpop.permute.xlu0 %2027
      %2029 = vrot.lane.b32.xlu0 %v1807, 32
      %v2030 = vpop.permute.xlu0 %2029
      %2031 = vrot.lane.b32.xlu0 %v1809, 32
      %v2032 = vpop.permute.xlu0 %2031
      %2033 = vrot.lane.b32.xlu0 %v1812, 32
      %v2034 = vpop.permute.xlu0 %2033
      %2035 = vrot.lane.b32.xlu0 %v1814, 32
      %v2036 = vpop.permute.xlu0 %2035
      %2037 = vrot.lane.b32.xlu0 %v1817, 32
      %v2038 = vpop.permute.xlu0 %2037
      %2039 = vrot.lane.b32.xlu0 %v1819, 32
      %v2040 = vpop.permute.xlu0 %2039
      %2041 = vrot.lane.b32.xlu0 %v1822, 32
      %v2042 = vpop.permute.xlu0 %2041
      %2043 = vrot.lane.b32.xlu0 %v1824, 32
      %v2044 = vpop.permute.xlu0 %2043
      %2045 = vrot.lane.b32.xlu0 %v1827, 32
      %v2046 = vpop.permute.xlu0 %2045
      %2047 = vrot.lane.b32.xlu0 %v1829, 32
      %v2048 = vpop.permute.xlu0 %2047
      %2049 = vrot.lane.b32.xlu0 %v2018, 32
      %v2050 = vpop.permute.xlu0 %2049
      %2051 = vrot.lane.b32.xlu0 %v2020, 32
      %v2052 = vpop.permute.xlu0 %2051
      %v2069 = vrot.slane %v1762, 2
      %v2070 = vrot.slane %v1722, 2
      %v2071 = vsel %vm606, %v2069, %v2070
      %v2072 = vrot.slane %v1772, 2
      %v2073 = vsel %vm606, %v2070, %v2072
      %2074 = vrot.lane.b32.xlu0 %v1885, 40
      %v2075 = vpop.permute.xlu0 %2074
      %2076 = vrot.lane.b32.xlu0 %v1887, 40
      %v2077 = vpop.permute.xlu0 %2076
      %2078 = vrot.lane.b32.xlu0 %v1890, 40
      %v2079 = vpop.permute.xlu0 %2078
      %2080 = vrot.lane.b32.xlu0 %v1892, 40
      %v2081 = vpop.permute.xlu0 %2080
      %2082 = vrot.lane.b32.xlu0 %v1895, 40
      %v2083 = vpop.permute.xlu0 %2082
      %2084 = vrot.lane.b32.xlu0 %v1897, 40
      %v2085 = vpop.permute.xlu0 %2084
      %2086 = vrot.lane.b32.xlu0 %v1900, 40
      %v2087 = vpop.permute.xlu0 %2086
      %2088 = vrot.lane.b32.xlu0 %v1902, 40
      %v2089 = vpop.permute.xlu0 %2088
      %2090 = vrot.lane.b32.xlu0 %v1905, 40
      %v2091 = vpop.permute.xlu0 %2090
      %2092 = vrot.lane.b32.xlu0 %v1907, 40
      %v2093 = vpop.permute.xlu0 %2092
      %2094 = vrot.lane.b32.xlu0 %v1910, 40
      %v2095 = vpop.permute.xlu0 %2094
      %2096 = vrot.lane.b32.xlu0 %v1912, 40
      %v2097 = vpop.permute.xlu0 %2096
      %2098 = vrot.lane.b32.xlu0 %v1915, 40
      %v2099 = vpop.permute.xlu0 %2098
      %2100 = vrot.lane.b32.xlu0 %v1917, 40
      %v2101 = vpop.permute.xlu0 %2100
      %2102 = vrot.lane.b32.xlu0 %v2071, 40
      %v2103 = vpop.permute.xlu0 %2102
      %2104 = vrot.lane.b32.xlu0 %v2073, 40
      %v2105 = vpop.permute.xlu0 %2104
      %2123 = vrot.lane.b32.xlu0 %v1756, 48
      %v2124 = vpop.permute.xlu0 %2123
      %2125 = vrot.lane.b32.xlu0 %v1704, 48
      %v2126 = vpop.permute.xlu0 %2125
      %2127 = vrot.lane.b32.xlu0 %v1757, 48
      %v2128 = vpop.permute.xlu0 %2127
      %2129 = vrot.lane.b32.xlu0 %v1707, 48
      %v2130 = vpop.permute.xlu0 %2129
      %2131 = vrot.lane.b32.xlu0 %v1758, 48
      %v2132 = vpop.permute.xlu0 %2131
      %2133 = vrot.lane.b32.xlu0 %v1710, 48
      %v2134 = vpop.permute.xlu0 %2133
      %2135 = vrot.lane.b32.xlu0 %v1759, 48
      %v2136 = vpop.permute.xlu0 %2135
      %2137 = vrot.lane.b32.xlu0 %v1713, 48
      %v2138 = vpop.permute.xlu0 %2137
      %2139 = vrot.lane.b32.xlu0 %v1760, 48
      %v2140 = vpop.permute.xlu0 %2139
      %2141 = vrot.lane.b32.xlu0 %v1716, 48
      %v2142 = vpop.permute.xlu0 %2141
      %2143 = vrot.lane.b32.xlu0 %v1761, 48
      %v2144 = vpop.permute.xlu0 %2143
      %2145 = vrot.lane.b32.xlu0 %v1719, 48
      %v2146 = vpop.permute.xlu0 %2145
      %2147 = vrot.lane.b32.xlu0 %v1762, 48
      %v2148 = vpop.permute.xlu0 %2147
      %2149 = vrot.lane.b32.xlu0 %v1722, 48
      %v2150 = vpop.permute.xlu0 %2149
      %2151 = vrot.lane.b32.xlu0 %v1763, 48
      %v2152 = vpop.permute.xlu0 %2151
      %2153 = vrot.lane.b32.xlu0 %v1725, 48
      %v2154 = vpop.permute.xlu0 %2153
      %v2172 = vrot.slane %v1763, 1
      %v2173 = vrot.slane %v1725, 1
      %v2174 = vsel %vm495, %v2172, %v2173
      %v2175 = vrot.slane %v1773, 1
      %v2176 = vsel %vm495, %v2173, %v2175
      %2177 = vrot.lane.b32.xlu0 %v1802, 56
      %v2178 = vpop.permute.xlu0 %2177
      %2179 = vrot.lane.b32.xlu0 %v1804, 56
      %v2180 = vpop.permute.xlu0 %2179
      %2181 = vrot.lane.b32.xlu0 %v1807, 56
      %v2182 = vpop.permute.xlu0 %2181
      %2183 = vrot.lane.b32.xlu0 %v1809, 56
      %v2184 = vpop.permute.xlu0 %2183
      %2185 = vrot.lane.b32.xlu0 %v1812, 56
      %v2186 = vpop.permute.xlu0 %2185
      %2187 = vrot.lane.b32.xlu0 %v1814, 56
      %v2188 = vpop.permute.xlu0 %2187
      %2189 = vrot.lane.b32.xlu0 %v1817, 56
      %v2190 = vpop.permute.xlu0 %2189
      %2191 = vrot.lane.b32.xlu0 %v1819, 56
      %v2192 = vpop.permute.xlu0 %2191
      %2193 = vrot.lane.b32.xlu0 %v1822, 56
      %v2194 = vpop.permute.xlu0 %2193
      %2195 = vrot.lane.b32.xlu0 %v1824, 56
      %v2196 = vpop.permute.xlu0 %2195
      %2197 = vrot.lane.b32.xlu0 %v1827, 56
      %v2198 = vpop.permute.xlu0 %2197
      %2199 = vrot.lane.b32.xlu0 %v1829, 56
      %v2200 = vpop.permute.xlu0 %2199
      %2201 = vrot.lane.b32.xlu0 %v2018, 56
      %v2202 = vpop.permute.xlu0 %2201
      %2203 = vrot.lane.b32.xlu0 %v2020, 56
      %v2204 = vpop.permute.xlu0 %2203
      %2205 = vrot.lane.b32.xlu0 %v2174, 56
      %v2206 = vpop.permute.xlu0 %2205
      %2207 = vrot.lane.b32.xlu0 %v2176, 56
      %v2208 = vpop.permute.xlu0 %2207
      %v2225 = vrot.slane %v1763, 2
      %v2226 = vrot.slane %v1725, 2
      %v2227 = vsel %vm606, %v2225, %v2226
      %v2228 = vrot.slane %v1773, 2
      %v2229 = vsel %vm606, %v2226, %v2228
      %2230 = vrot.lane.b32.xlu0 %v1890, 64
      %v2231 = vpop.permute.xlu0 %2230
      %2232 = vrot.lane.b32.xlu0 %v1892, 64
      %v2233 = vpop.permute.xlu0 %2232
      %2234 = vrot.lane.b32.xlu0 %v1895, 64
      %v2235 = vpop.permute.xlu0 %2234
      %2236 = vrot.lane.b32.xlu0 %v1897, 64
      %v2237 = vpop.permute.xlu0 %2236
      %2238 = vrot.lane.b32.xlu0 %v1900, 64
      %v2239 = vpop.permute.xlu0 %2238
      %2240 = vrot.lane.b32.xlu0 %v1902, 64
      %v2241 = vpop.permute.xlu0 %2240
      %2242 = vrot.lane.b32.xlu0 %v1905, 64
      %v2243 = vpop.permute.xlu0 %2242
      %2244 = vrot.lane.b32.xlu0 %v1907, 64
      %v2245 = vpop.permute.xlu0 %2244
      %2246 = vrot.lane.b32.xlu0 %v1910, 64
      %v2247 = vpop.permute.xlu0 %2246
      %2248 = vrot.lane.b32.xlu0 %v1912, 64
      %v2249 = vpop.permute.xlu0 %2248
      %2250 = vrot.lane.b32.xlu0 %v1915, 64
      %v2251 = vpop.permute.xlu0 %2250
      %2252 = vrot.lane.b32.xlu0 %v1917, 64
      %v2253 = vpop.permute.xlu0 %2252
      %2254 = vrot.lane.b32.xlu0 %v2071, 64
      %v2255 = vpop.permute.xlu0 %2254
      %2256 = vrot.lane.b32.xlu0 %v2073, 64
      %v2257 = vpop.permute.xlu0 %2256
      %2258 = vrot.lane.b32.xlu0 %v2227, 64
      %v2259 = vpop.permute.xlu0 %2258
      %2260 = vrot.lane.b32.xlu0 %v2229, 64
      %v2261 = vpop.permute.xlu0 %2260
      %v2278 = vsel %vm1124, %v1754, %v1831
      %v2279 = vsel %vm1124, %v1698, %v1833
      %v2280 = vsel %vm1124, %v1755, %v1835
      %v2281 = vsel %vm1124, %v1701, %v1837
      %v2282 = vsel %vm1124, %v1756, %v1839
      %v2283 = vsel %vm1124, %v1704, %v1841
      %v2284 = vsel %vm1124, %v1757, %v1843
      %v2285 = vsel %vm1124, %v1707, %v1845
      %v2286 = vsel %vm1124, %v1758, %v1847
      %v2287 = vsel %vm1124, %v1710, %v1849
      %v2288 = vsel %vm1124, %v1759, %v1851
      %v2289 = vsel %vm1124, %v1713, %v1853
      %v2290 = vsel %vm1124, %v1760, %v1855
      %v2291 = vsel %vm1124, %v1716, %v1857
      %v2292 = vsel %vm1124, %v1761, %v1859
      %v2293 = vsel %vm1124, %v1719, %v1861
      %v2294 = vsel %vm1166, %v2278, %v1919
      %v2295 = vsel %vm1166, %v2279, %v1921
      %v2296 = vsel %vm1166, %v2280, %v1923
      %v2297 = vsel %vm1166, %v2281, %v1925
      %v2298 = vsel %vm1166, %v2282, %v1927
      %v2299 = vsel %vm1166, %v2283, %v1929
      %v2300 = vsel %vm1166, %v2284, %v1931
      %v2301 = vsel %vm1166, %v2285, %v1933
      %v2302 = vsel %vm1166, %v2286, %v1935
      %v2303 = vsel %vm1166, %v2287, %v1937
      %v2304 = vsel %vm1166, %v2288, %v1939
      %v2305 = vsel %vm1166, %v2289, %v1941
      %v2306 = vsel %vm1166, %v2290, %v1943
      %v2307 = vsel %vm1166, %v2291, %v1945
      %v2308 = vsel %vm1166, %v2292, %v1947
      %v2309 = vsel %vm1166, %v2293, %v1949
      %v2310 = vsel %vm1208, %v2294, %v1968
      %v2311 = vsel %vm1208, %v2295, %v1970
      %v2312 = vsel %vm1208, %v2296, %v1972
      %v2313 = vsel %vm1208, %v2297, %v1974
      %v2314 = vsel %vm1208, %v2298, %v1976
      %v2315 = vsel %vm1208, %v2299, %v1978
      %v2316 = vsel %vm1208, %v2300, %v1980
      %v2317 = vsel %vm1208, %v2301, %v1982
      %v2318 = vsel %vm1208, %v2302, %v1984
      %v2319 = vsel %vm1208, %v2303, %v1986
      %v2320 = vsel %vm1208, %v2304, %v1988
      %v2321 = vsel %vm1208, %v2305, %v1990
      %v2322 = vsel %vm1208, %v2306, %v1992
      %v2323 = vsel %vm1208, %v2307, %v1994
      %v2324 = vsel %vm1208, %v2308, %v1996
      %v2325 = vsel %vm1208, %v2309, %v1998
      %v2326 = vsel %vm1250, %v2310, %v2022
      %v2327 = vsel %vm1250, %v2311, %v2024
      %v2328 = vsel %vm1250, %v2312, %v2026
      %v2329 = vsel %vm1250, %v2313, %v2028
      %v2330 = vsel %vm1250, %v2314, %v2030
      %v2331 = vsel %vm1250, %v2315, %v2032
      %v2332 = vsel %vm1250, %v2316, %v2034
      %v2333 = vsel %vm1250, %v2317, %v2036
      %v2334 = vsel %vm1250, %v2318, %v2038
      %v2335 = vsel %vm1250, %v2319, %v2040
      %v2336 = vsel %vm1250, %v2320, %v2042
      %v2337 = vsel %vm1250, %v2321, %v2044
      %v2338 = vsel %vm1250, %v2322, %v2046
      %v2339 = vsel %vm1250, %v2323, %v2048
      %v2340 = vsel %vm1250, %v2324, %v2050
      %v2341 = vsel %vm1250, %v2325, %v2052
      %vm2342 = vcmask 326656
      %v2343 = vsel %vm2342, %v2326, %v2075
      %v2344 = vsel %vm2342, %v2327, %v2077
      %v2345 = vsel %vm2342, %v2328, %v2079
      %v2346 = vsel %vm2342, %v2329, %v2081
      %v2347 = vsel %vm2342, %v2330, %v2083
      %v2348 = vsel %vm2342, %v2331, %v2085
      %v2349 = vsel %vm2342, %v2332, %v2087
      %v2350 = vsel %vm2342, %v2333, %v2089
      %v2351 = vsel %vm2342, %v2334, %v2091
      %v2352 = vsel %vm2342, %v2335, %v2093
      %v2353 = vsel %vm2342, %v2336, %v2095
      %v2354 = vsel %vm2342, %v2337, %v2097
      %v2355 = vsel %vm2342, %v2338, %v2099
      %v2356 = vsel %vm2342, %v2339, %v2101
      %v2357 = vsel %vm2342, %v2340, %v2103
      %v2358 = vsel %vm2342, %v2341, %v2105
      %vm2359 = vcmask 392192
      %v2360 = vsel %vm2359, %v2343, %v2124
      %v2361 = vsel %vm2359, %v2344, %v2126
      %v2362 = vsel %vm2359, %v2345, %v2128
      %v2363 = vsel %vm2359, %v2346, %v2130
      %v2364 = vsel %vm2359, %v2347, %v2132
      %v2365 = vsel %vm2359, %v2348, %v2134
      %v2366 = vsel %vm2359, %v2349, %v2136
      %v2367 = vsel %vm2359, %v2350, %v2138
      %v2368 = vsel %vm2359, %v2351, %v2140
      %v2369 = vsel %vm2359, %v2352, %v2142
      %v2370 = vsel %vm2359, %v2353, %v2144
      %v2371 = vsel %vm2359, %v2354, %v2146
      %v2372 = vsel %vm2359, %v2355, %v2148
      %v2373 = vsel %vm2359, %v2356, %v2150
      %v2374 = vsel %vm2359, %v2357, %v2152
      %v2375 = vsel %vm2359, %v2358, %v2154
      %vm2376 = vcmask 457728
      %v2377 = vsel %vm2376, %v2360, %v2178
      %v2378 = vsel %vm2376, %v2361, %v2180
      %v2379 = vsel %vm2376, %v2362, %v2182
      %v2380 = vsel %vm2376, %v2363, %v2184
      %v2381 = vsel %vm2376, %v2364, %v2186
      %v2382 = vsel %vm2376, %v2365, %v2188
      %v2383 = vsel %vm2376, %v2366, %v2190
      %v2384 = vsel %vm2376, %v2367, %v2192
      %v2385 = vsel %vm2376, %v2368, %v2194
      %v2386 = vsel %vm2376, %v2369, %v2196
      %v2387 = vsel %vm2376, %v2370, %v2198
      %v2388 = vsel %vm2376, %v2371, %v2200
      %v2389 = vsel %vm2376, %v2372, %v2202
      %v2390 = vsel %vm2376, %v2373, %v2204
      %v2391 = vsel %vm2376, %v2374, %v2206
      %v2392 = vsel %vm2376, %v2375, %v2208
      %vm2393 = vcmask 523264
      %v2394 = vsel %vm2393, %v2377, %v2231
      %v2395 = vsel %vm2393, %v2378, %v2233
      %v2396 = vsel %vm2393, %v2379, %v2235
      %v2397 = vsel %vm2393, %v2380, %v2237
      %v2398 = vsel %vm2393, %v2381, %v2239
      %v2399 = vsel %vm2393, %v2382, %v2241
      %v2400 = vsel %vm2393, %v2383, %v2243
      %v2401 = vsel %vm2393, %v2384, %v2245
      %v2402 = vsel %vm2393, %v2385, %v2247
      %v2403 = vsel %vm2393, %v2386, %v2249
      %v2404 = vsel %vm2393, %v2387, %v2251
      %v2405 = vsel %vm2393, %v2388, %v2253
      %v2406 = vsel %vm2393, %v2389, %v2255
      %v2407 = vsel %vm2393, %v2390, %v2257
      %v2408 = vsel %vm2393, %v2391, %v2259
      %v2409 = vsel %vm2393, %v2392, %v2261
      %v2410 = vpack.c.bf16 %v2395, %v2394
      %v2411 = vpack.c.bf16 %v2397, %v2396
      %v2412 = vpack.c.bf16 %v2399, %v2398
      %v2413 = vpack.c.bf16 %v2401, %v2400
      %v2414 = vpack.c.bf16 %v2403, %v2402
      %v2415 = vpack.c.bf16 %v2405, %v2404
      %v2416 = vpack.c.bf16 %v2407, %v2406
      %v2417 = vpack.c.bf16 %v2409, %v2408
      %v2418 = vld [vmem:[%s5] sm:$0xf]
      %v2419 = vld [vmem:[%s5 + $0x4] sm:$0xf]
      %v2420 = vld [vmem:[%s5 + $0x8] sm:$0xf]
      %v2421 = vld [vmem:[%s5 + $0xc] sm:$0xf]
      %v2422 = vld [vmem:[%s5 + $0x10] sm:$0xf]
      %v2423 = vld [vmem:[%s5 + $0x14] sm:$0xf]
      %v2424 = vld [vmem:[%s5 + $0x18] sm:$0xf]
      %v2425 = vld [vmem:[%s5 + $0x1c] sm:$0xf]
      %v2426 = vld [vmem:[%s5 + $0x20] sm:$0xf]
      %v2436 = vunpack.c.l.b16 %v2418
      %v2437 = vunpack.c.l.b16 %v2419
      %v2438 = vunpack.c.l.b16 %v2420
      %v2439 = vunpack.c.l.b16 %v2421
      %v2440 = vunpack.c.l.b16 %v2422
      %v2441 = vunpack.c.l.b16 %v2423
      %v2442 = vunpack.c.l.b16 %v2424
      %v2443 = vunpack.c.l.b16 %v2425
      %v2444 = vunpack.c.l.b16 %v2426
      %v2445 = vpack.c.b16 %v2437, %v2436
      %v2446 = vpack.c.b16 %v2439, %v2438
      %v2447 = vpack.c.b16 %v2441, %v2440
      %v2448 = vpack.c.b16 %v2443, %v2442
      %v2449 = vpack.c.b16 %v2444, %v2444
      %vm2454 = vcmask 588800
      %v2456 = vsel %vm2454, %v2410, 0
      %v2459 = vsel %vm2454, %v2411, 0
      %v2462 = vsel %vm2454, %v2412, 0
      %v2465 = vsel %vm2454, %v2413, 0
      %v2468 = vsel %vm2454, %v2414, 0
      %v2471 = vsel %vm2454, %v2415, 0
      %v2474 = vsel %vm2454, %v2416, 0
      %v2477 = vsel %vm2454, %v2417, 0
      %vm2479 = vcmask 1043456
      %v2481 = vsel %vm2479, %v2449, 0
      %2483 = vmatprep.subr.bf16.mxu0 0
      %2484 = vmatpush1.bf16.msra.mxu0 %v2445
      %2485 = vmatprep.subr.bf16.mxu0 0
      %2486 = vmatpush1.bf16.msra.mxu0 %v2446
      %2487 = vmatprep.subr.bf16.mxu0 0
      %2488 = vmatpush1.bf16.msra.mxu0 %v2447
      %2489 = vmatprep.subr.bf16.mxu0 0
      %2490 = vmatpush1.bf16.msra.mxu0 %v2448
      %2491 = vmatprep.subr.bf16.mxu0 0
      %2492 = vmatpush1.bf16.msra.mxu0 %v2481
      %2493 = vmatprep.subr.bf16.mxu0 0
      %2494 = vmatpush1.bf16.msra.mxu0 0
      %2495 = vmatprep.subr.bf16.mxu0 0
      %2496 = vmatpush1.bf16.msra.mxu0 0
      %2497 = vmatprep.subr.bf16.mxu0 0
      %2498 = vmatpush1.bf16.msra.mxu0 0
      %2499 = vmatprep.subr.bf16.mxu0 0
      %2500 = vmatpush1.bf16.msra.mxu0 0
      %2501 = vmatprep.subr.bf16.mxu0 0
      %2502 = vmatpush1.bf16.msra.mxu0 0
      %2503 = vmatprep.subr.bf16.mxu0 0
      %2504 = vmatpush1.bf16.msra.mxu0 0
      %2505 = vmatprep.subr.bf16.mxu0 0
      %2506 = vmatpush1.bf16.msra.mxu0 0
      %2507 = vmatprep.subr.bf16.mxu0 0
      %2508 = vmatpush1.bf16.msra.mxu0 0
      %2509 = vmatprep.subr.bf16.mxu0 0
      %2510 = vmatpush1.bf16.msra.mxu0 0
      %2511 = vmatprep.subr.bf16.mxu0 0
      %2512 = vmatpush1.bf16.msra.mxu0 0
      %2513 = vmatprep.subr.bf16.mxu0 0
      %2514 = vmatpush1.bf16.msra.mxu0 0
      %2515 = vmatprep.mubr.bf16.mxu0 0
      %2516 = vmatmul.mubr.bf16.gmra.mrb[0].mxu0 %v2456
      %v2517 = vpop.f32.mrb[0].mxu0
      %v2518 = vadd.f32 0.0, %v2517
      %v2519 = vpop.f32.mrb[0].mxu0
      %v2520 = vpop.f32.mrb[0].mxu0
      %v2521 = vadd.f32 0.0, %v2520
      %v2522 = vpop.f32.mrb[0].mxu0
      %2523 = vmatprep.mubr.bf16.mxu0 0
      %2524 = vmatmul.mubr.bf16.gmra.mrb[0].mxu0 %v2459
      %v2525 = vpop.f32.mrb[0].mxu0
      %v2526 = vadd.f32 0.0, %v2525
      %v2527 = vpop.f32.mrb[0].mxu0
      %v2528 = vpop.f32.mrb[0].mxu0
      %v2529 = vadd.f32 0.0, %v2528
      %v2530 = vpop.f32.mrb[0].mxu0
      %2531 = vmatprep.mubr.bf16.mxu0 0
      %2532 = vmatmul.mubr.bf16.gmra.mrb[0].mxu0 %v2462
      %v2533 = vpop.f32.mrb[0].mxu0
      %v2534 = vadd.f32 0.0, %v2533
      %v2535 = vpop.f32.mrb[0].mxu0
      %v2536 = vpop.f32.mrb[0].mxu0
      %v2537 = vadd.f32 0.0, %v2536
      %v2538 = vpop.f32.mrb[0].mxu0
      %2539 = vmatprep.mubr.bf16.mxu0 0
      %2540 = vmatmul.mubr.bf16.gmra.mrb[0].mxu0 %v2465
      %v2541 = vpop.f32.mrb[0].mxu0
      %v2542 = vadd.f32 0.0, %v2541
      %v2543 = vpop.f32.mrb[0].mxu0
      %v2544 = vpop.f32.mrb[0].mxu0
      %v2545 = vadd.f32 0.0, %v2544
      %v2546 = vpop.f32.mrb[0].mxu0
      %2547 = vmatprep.mubr.bf16.mxu0 0
      %2548 = vmatmul.mubr.bf16.gmra.mrb[0].mxu0 %v2468
      %v2549 = vpop.f32.mrb[0].mxu0
      %v2550 = vadd.f32 0.0, %v2549
      %v2551 = vpop.f32.mrb[0].mxu0
      %v2552 = vpop.f32.mrb[0].mxu0
      %v2553 = vadd.f32 0.0, %v2552
      %v2554 = vpop.f32.mrb[0].mxu0
      %2555 = vmatprep.mubr.bf16.mxu0 0
      %2556 = vmatmul.mubr.bf16.gmra.mrb[0].mxu0 %v2471
      %v2557 = vpop.f32.mrb[0].mxu0
      %v2558 = vadd.f32 0.0, %v2557
      %v2559 = vpop.f32.mrb[0].mxu0
      %v2560 = vpop.f32.mrb[0].mxu0
      %v2561 = vadd.f32 0.0, %v2560
      %v2562 = vpop.f32.mrb[0].mxu0
      %2563 = vmatprep.mubr.bf16.mxu0 0
      %2564 = vmatmul.mubr.bf16.gmra.mrb[0].mxu0 %v2474
      %v2565 = vpop.f32.mrb[0].mxu0
      %v2566 = vadd.f32 0.0, %v2565
      %v2567 = vpop.f32.mrb[0].mxu0
      %v2568 = vpop.f32.mrb[0].mxu0
      %v2569 = vadd.f32 0.0, %v2568
      %v2570 = vpop.f32.mrb[0].mxu0
      %2571 = vmatprep.mubr.bf16.mxu0 0
      %2572 = vmatmul.mubr.bf16.gmra.mrb[0].mxu0 %v2477
      %v2573 = vpop.f32.mrb[0].mxu0
      %v2574 = vadd.f32 0.0, %v2573
      %v2575 = vpop.f32.mrb[0].mxu0
      %v2576 = vpop.f32.mrb[0].mxu0
      %v2577 = vadd.f32 0.0, %v2576
      %v2578 = vpop.f32.mrb[0].mxu0
      %2579 = vdwg.mxu0
      %v2580 = vld [vmem:[%s6] sm:$0x1]
      %v2582 = vlaneseq
      %v2583 = vshrl.u32 %v2582, 7
      %v2584 = vsub.s32 0, %v2583
      %v2585 = vrot.slane %v2580, %v2584
      %v2587 = vmul.f32 %v2518, %v2585
      %v2588 = vmul.f32 %v2521, %v2585
      %v2589 = vmul.f32 %v2526, %v2585
      %v2590 = vmul.f32 %v2529, %v2585
      %v2591 = vmul.f32 %v2534, %v2585
      %v2592 = vmul.f32 %v2537, %v2585
      %v2593 = vmul.f32 %v2542, %v2585
      %v2594 = vmul.f32 %v2545, %v2585
      %v2595 = vmul.f32 %v2550, %v2585
      %v2596 = vmul.f32 %v2553, %v2585
      %v2597 = vmul.f32 %v2558, %v2585
      %v2598 = vmul.f32 %v2561, %v2585
      %v2599 = vmul.f32 %v2566, %v2585
      %v2600 = vmul.f32 %v2569, %v2585
      %v2601 = vmul.f32 %v2574, %v2585
      %v2602 = vmul.f32 %v2577, %v2585
      %v2603 = vld [vmem:[%s7] sm:$0x1]
      %v2605 = vlaneseq
      %v2606 = vshrl.u32 %v2605, 7
      %v2607 = vsub.s32 0, %v2606
      %v2608 = vrot.slane %v2603, %v2607
      %v2610 = vadd.f32 %v2587, %v2608
      %v2611 = vadd.f32 %v2588, %v2608
      %v2612 = vadd.f32 %v2589, %v2608
      %v2613 = vadd.f32 %v2590, %v2608
      %v2614 = vadd.f32 %v2591, %v2608
      %v2615 = vadd.f32 %v2592, %v2608
      %v2616 = vadd.f32 %v2593, %v2608
      %v2617 = vadd.f32 %v2594, %v2608
      %v2618 = vadd.f32 %v2595, %v2608
      %v2619 = vadd.f32 %v2596, %v2608
      %v2620 = vadd.f32 %v2597, %v2608
      %v2621 = vadd.f32 %v2598, %v2608
      %v2622 = vadd.f32 %v2599, %v2608
      %v2623 = vadd.f32 %v2600, %v2608
      %v2624 = vadd.f32 %v2601, %v2608
      %v2625 = vadd.f32 %v2602, %v2608
      %v2626 = vxor.u32 %v2610, 2147483648
      %v2627 = vxor.u32 %v2611, 2147483648
      %v2628 = vxor.u32 %v2612, 2147483648
      %v2629 = vxor.u32 %v2613, 2147483648
      %v2630 = vxor.u32 %v2614, 2147483648
      %v2631 = vxor.u32 %v2615, 2147483648
      %v2632 = vxor.u32 %v2616, 2147483648
      %v2633 = vxor.u32 %v2617, 2147483648
      %v2634 = vxor.u32 %v2618, 2147483648
      %v2635 = vxor.u32 %v2619, 2147483648
      %v2636 = vxor.u32 %v2620, 2147483648
      %v2637 = vxor.u32 %v2621, 2147483648
      %v2638 = vxor.u32 %v2622, 2147483648
      %v2639 = vxor.u32 %v2623, 2147483648
      %v2640 = vxor.u32 %v2624, 2147483648
      %v2641 = vxor.u32 %v2625, 2147483648
      %v2642 = vmul.f32 %v2626, 1.442695
      %v2643 = vpow.pop %v2642
      %v2644 = vmul.f32 %v2627, 1.442695
      %v2645 = vpow.pop %v2644
      %v2646 = vmul.f32 %v2628, 1.442695
      %v2647 = vpow.pop %v2646
      %v2648 = vmul.f32 %v2629, 1.442695
      %v2649 = vpow.pop %v2648
      %v2650 = vmul.f32 %v2630, 1.442695
      %v2651 = vpow.pop %v2650
      %v2652 = vmul.f32 %v2631, 1.442695
      %v2653 = vpow.pop %v2652
      %v2654 = vmul.f32 %v2632, 1.442695
      %v2655 = vpow.pop %v2654
      %v2656 = vmul.f32 %v2633, 1.442695
      %v2657 = vpow.pop %v2656
      %v2658 = vmul.f32 %v2634, 1.442695
      %v2659 = vpow.pop %v2658
      %v2660 = vmul.f32 %v2635, 1.442695
      %v2661 = vpow.pop %v2660
      %v2662 = vmul.f32 %v2636, 1.442695
      %v2663 = vpow.pop %v2662
      %v2664 = vmul.f32 %v2637, 1.442695
      %v2665 = vpow.pop %v2664
      %v2666 = vmul.f32 %v2638, 1.442695
      %v2667 = vpow.pop %v2666
      %v2668 = vmul.f32 %v2639, 1.442695
      %v2669 = vpow.pop %v2668
      %v2670 = vmul.f32 %v2640, 1.442695
      %v2671 = vpow.pop %v2670
      %v2672 = vmul.f32 %v2641, 1.442695
      %v2673 = vpow.pop %v2672
      %v2674 = vadd.f32 %v2643, 1.0
      %v2675 = vadd.f32 %v2645, 1.0
      %v2676 = vadd.f32 %v2647, 1.0
      %v2677 = vadd.f32 %v2649, 1.0
      %v2678 = vadd.f32 %v2651, 1.0
      %v2679 = vadd.f32 %v2653, 1.0
      %v2680 = vadd.f32 %v2655, 1.0
      %v2681 = vadd.f32 %v2657, 1.0
      %v2682 = vadd.f32 %v2659, 1.0
      %v2683 = vadd.f32 %v2661, 1.0
      %v2684 = vadd.f32 %v2663, 1.0
      %v2685 = vadd.f32 %v2665, 1.0
      %v2686 = vadd.f32 %v2667, 1.0
      %v2687 = vadd.f32 %v2669, 1.0
      %v2688 = vadd.f32 %v2671, 1.0
      %v2689 = vadd.f32 %v2673, 1.0
      %v2690 = vrcp.pop %v2674
      %v2691 = vmul.f32 1.0, %v2690
      %v2692 = vrcp.pop %v2675
      %v2693 = vmul.f32 1.0, %v2692
      %v2694 = vrcp.pop %v2676
      %v2695 = vmul.f32 1.0, %v2694
      %v2696 = vrcp.pop %v2677
      %v2697 = vmul.f32 1.0, %v2696
      %v2698 = vrcp.pop %v2678
      %v2699 = vmul.f32 1.0, %v2698
      %v2700 = vrcp.pop %v2679
      %v2701 = vmul.f32 1.0, %v2700
      %v2702 = vrcp.pop %v2680
      %v2703 = vmul.f32 1.0, %v2702
      %v2704 = vrcp.pop %v2681
      %v2705 = vmul.f32 1.0, %v2704
      %v2706 = vrcp.pop %v2682
      %v2707 = vmul.f32 1.0, %v2706
      %v2708 = vrcp.pop %v2683
      %v2709 = vmul.f32 1.0, %v2708
      %v2710 = vrcp.pop %v2684
      %v2711 = vmul.f32 1.0, %v2710
      %v2712 = vrcp.pop %v2685
      %v2713 = vmul.f32 1.0, %v2712
      %v2714 = vrcp.pop %v2686
      %v2715 = vmul.f32 1.0, %v2714
      %v2716 = vrcp.pop %v2687
      %v2717 = vmul.f32 1.0, %v2716
      %v2718 = vrcp.pop %v2688
      %v2719 = vmul.f32 1.0, %v2718
      %v2720 = vrcp.pop %v2689
      %v2721 = vmul.f32 1.0, %v2720
      %v2722 = vmul.f32 %v2610, %v2691
      %v2723 = vmul.f32 %v2611, %v2693
      %v2724 = vmul.f32 %v2612, %v2695
      %v2725 = vmul.f32 %v2613, %v2697
      %v2726 = vmul.f32 %v2614, %v2699
      %v2727 = vmul.f32 %v2615, %v2701
      %v2728 = vmul.f32 %v2616, %v2703
      %v2729 = vmul.f32 %v2617, %v2705
      %v2730 = vmul.f32 %v2618, %v2707
      %v2731 = vmul.f32 %v2619, %v2709
      %v2732 = vmul.f32 %v2620, %v2711
      %v2733 = vmul.f32 %v2621, %v2713
      %v2734 = vmul.f32 %v2622, %v2715
      %v2735 = vmul.f32 %v2623, %v2717
      %v2736 = vmul.f32 %v2624, %v2719
      %v2737 = vmul.f32 %v2625, %v2721
      %2738 = vst.msk [vmem:[%s426] sm:$0xff] %vm1124, %v2722
      %2739 = vst.msk [vmem:[%s426 + $0x8] sm:$0xff] %vm1124, %v2723
      %2740 = vst.msk [vmem:[%s426 + $0x10] sm:$0xff] %vm1124, %v2724
      %2741 = vst.msk [vmem:[%s426 + $0x18] sm:$0xff] %vm1124, %v2725
      %2742 = vst.msk [vmem:[%s426 + $0x20] sm:$0xff] %vm1124, %v2726
      %2743 = vst.msk [vmem:[%s426 + $0x28] sm:$0xff] %vm1124, %v2727
      %2744 = vst.msk [vmem:[%s426 + $0x30] sm:$0xff] %vm1124, %v2728
      %2745 = vst.msk [vmem:[%s426 + $0x38] sm:$0xff] %vm1124, %v2729
      %2746 = vst.msk [vmem:[%s426 + $0x40] sm:$0xff] %vm1124, %v2730
      %2747 = vst.msk [vmem:[%s426 + $0x48] sm:$0xff] %vm1124, %v2731
      %2748 = vst.msk [vmem:[%s426 + $0x50] sm:$0xff] %vm1124, %v2732
      %2749 = vst.msk [vmem:[%s426 + $0x58] sm:$0xff] %vm1124, %v2733
      %2750 = vst.msk [vmem:[%s426 + $0x60] sm:$0xff] %vm1124, %v2734
      %2751 = vst.msk [vmem:[%s426 + $0x68] sm:$0xff] %vm1124, %v2735
      %2752 = vst.msk [vmem:[%s426 + $0x70] sm:$0xff] %vm1124, %v2736
      %2753 = vst.msk [vmem:[%s426 + $0x78] sm:$0xff] %vm1124, %v2737
      %s2754 = smul.u32 8, %s24
      %p2755 = scmp.lt.s32.totalorder %s23, 1
      %s2756 = scalar_select %p2755, %s23, 1
      %p2757 = scmp.lt.s32.totalorder %s2754, 15
      %s2758 = scalar_select %p2757, %s2754, 15
      %s2759 = smul.addr %s2758, 2
      %s2760 = smul.addr %s2756, 32
      %s2761 = sadd.s32 %s2759, %s2760
      %s2762 = smul.addr %s2761, 8
      %s2763 = scalar_lea.vmem %s8, %s2762
      // Predicated region
      $region53: #{tpu_custom_call.1} parent=51 // pred_check
        %p2764 = pneg %p237
      $region54: #{tpu_custom_call.1} parent=51 // pred_check_branch
        %2766 = sbr.rel (%p2764) target = $region56
      $region55: #{tpu_custom_call.1} parent=51 // pred_region
        %s2767 = smul.u32 8, %s24
      $region56: #{tpu_custom_call.1} parent=51 // pred_fallthru
        _
    $region52: #{tpu_custom_call.1} parent=5 // pred_fallthru
      _
    %p2768 = scmp.le.s32.totalorder 2, %s14
    // Predicated region
    $region57: #{tpu_custom_call.1} parent=5 // pred_check
      %p2769 = pneg %p2768
    $region58: #{tpu_custom_call.1} parent=5 // pred_check_branch
      %2771 = sbr.rel (%p2769) target = $region60
    $region59: #{tpu_custom_call.1} parent=5 // pred_region
      %s2772 = ssub.s32 %s14, 2
      // Predicated region
      $region61: #{tpu_custom_call.1} parent=59 // pred_check
        %p2773 = pneg %p243
      $region62: #{tpu_custom_call.1} parent=59 // pred_check_branch
        %2775 = sbr.rel (%p2773) target = $region64
      $region63: #{tpu_custom_call.1} parent=59 // pred_region
        %s2776 = smul.u32 8, %s26
        %p2777 = scmp.lt.s32.totalorder %s25, 1
        %s2778 = scalar_select %p2777, %s25, 1
        %p2779 = scmp.lt.s32.totalorder %s2776, 15
        %s2780 = scalar_select %p2779, %s2776, 15
        %s2781 = smul.addr %s2780, 2
        %s2782 = smul.addr %s2778, 32
        %s2783 = sadd.s32 %s2781, %s2782
        %s2784 = smul.addr %s2783, 8
        %s2785 = scalar_lea.vmem %s8, %s2784
      $region64: #{tpu_custom_call.1} parent=59 // pred_fallthru
        _
    $region60: #{tpu_custom_call.1} parent=5 // pred_fallthru
      _
  $region6: #{tpu_custom_call.1} parent=0 // loop_footer
    %s18 = sadd.s32 1, %s14
  $region7: #{tpu_custom_call.1} parent=0 // loop_footer_branch
    %13 = sbr.rel target = $region3
  $region8: #{tpu_custom_call.1} parent=0 // loop_exit
    _

</llo_original>
